<compile_context>
chip_gen: v6e
topology: v6e:2x2x1
jax: 0.10.0
libtpu: 0.0.40
codegen_flags: <defaults>
</compile_context>

<pallas_src>
import functools

import jax
import jax.numpy as jnp
from jax.experimental import pallas as pl
from jax.experimental.pallas import tpu as pltpu


# --------------------------------------------------------------------------------------
# Kernel
# --------------------------------------------------------------------------------------
def _matchnet_kernel(
    fact_ref,    # [B, Hp]       bf16
    sec_ref,     # [S, Hp]       bf16
    w_ih_ref,    # [Hp, 2*Gd]    bf16  (fwd packed gates | bwd packed gates)
    b_ih_ref,    # [1, 2*Gd]     f32   (b_ih + b_hh, both directions)
    w_hh_ref,    # [2*Hd, 2*Gd]  bf16  block-diagonal (fwd | bwd)
    w_attn_ref,  # [2*Hd, Hp]    bf16
    b_attn_ref,  # [1, Hp]       f32
    ctx_ref,     # [1, Hp]       f32   context as a lane row (VPU dot)
    w_m1_ref,    # [Hp, Lp]      bf16  match_fc, fact half
    w_m2_ref,    # [2*Hd, Lp]    bf16  match_fc, sec_hidden half
    b_m_ref,     # [1, Lp]       f32
    logits_ref,  # [B, Lp]       f32   out
    scores_ref,  # [B, Lp]       f32   out
    xp_scr,      # [S, 2*Gd]     f32   VMEM: hoisted input projections (both directions)
    *,
    hh,          # real per-direction hidden size (static)
):
    S = sec_ref.shape[0]
    Gd = w_ih_ref.shape[1] // 2   # per-direction packed gate block width (128)
    Hd = w_hh_ref.shape[0] // 2   # per-direction hidden-state lane width (128)
    f32 = jnp.float32
    bf16 = jnp.bfloat16

    # (1) Hoisted input projection for BOTH directions (bf16 MXU, f32 accum), biases folded.
    xp_scr[...] = (
        jnp.dot(sec_ref[...], w_ih_ref[...], preferred_element_type=f32)
        + b_ih_ref[...]
    )

    # Lane mask marking the g-gate sub-block inside the packed [i|f|g|o|pad] layout.
    lane = jax.lax.broadcasted_iota(jnp.int32, (1, Gd), 1)
    g_mask = (lane >= 2 * hh) & (lane < 3 * hh)

    def lstm_cell(gates, c):
        # gates: [1, Gd] packed [i|f|g|o|0-pad]; PyTorch gate order i, f, g, o.
        act = jnp.where(g_mask, jnp.tanh(gates), jax.nn.sigmoid(gates))
        i_v = act
        f_v = pltpu.roll(act, shift=Gd - hh, axis=1)       # XLU lane rotations (idle slot)
        g_v = pltpu.roll(act, shift=Gd - 2 * hh, axis=1)
        o_v = pltpu.roll(act, shift=Gd - 3 * hh, axis=1)
        c_new = f_v * c + i_v * g_v
        h_new = o_v * jnp.tanh(c_new)
        # Lanes >= hh carry rotated junk; harmless (all downstream weight rows there are 0,
        # and |values| stay bounded by products/sums of sigmoids & tanhs).
        return h_new, c_new

    # Fused, fully-unrolled bidirectional recurrence (S static -> trace-time unroll).
    h_f = jnp.zeros((1, Hd), f32)
    c_f = jnp.zeros((1, Hd), f32)
    h_b = jnp.zeros((1, Hd), f32)
    c_b = jnp.zeros((1, Hd), f32)
    rows_f = [None] * S
    rows_b = [None] * S
    for t in range(S):
        rb = S - 1 - t
        if t == 0:
            gates_f = xp_scr[pl.ds(t, 1), 0:Gd]
            gates_b = xp_scr[pl.ds(rb, 1), Gd:2 * Gd]
        else:
            # (3) One block-diagonal recurrence matmul for both directions; (4) w_hh ref is
            # read inside the loop each iteration (short live range, no vreg blowup).
            h_cat = jnp.concatenate([h_f, h_b], axis=1).astype(bf16)        # [1, 2*Hd]
            rec = jnp.dot(h_cat, w_hh_ref[...], preferred_element_type=f32)  # [1, 2*Gd]
            gates_f = xp_scr[pl.ds(t, 1), 0:Gd] + rec[:, 0:Gd]
            gates_b = xp_scr[pl.ds(rb, 1), Gd:2 * Gd] + rec[:, Gd:2 * Gd]
        h_f, c_f = lstm_cell(gates_f, c_f)
        h_b, c_b = lstm_cell(gates_b, c_b)
        rows_f[t] = h_f
        rows_b[rb] = h_b

    # (5) Register assembly of the BiLSTM output (no masked stores, no scratch readback).
    out_f = jnp.concatenate(rows_f, axis=0)                 # [S, Hd]
    out_b = jnp.concatenate(rows_b, axis=0)                 # [S, Hd]
    outputs = jnp.concatenate([out_f, out_b], axis=1)       # [S, 2*Hd] f32

    # Attention (dropout = identity in eval; all-ones mask -> masked_fill is a no-op).
    act = jnp.tanh(
        jnp.dot(outputs.astype(bf16), w_attn_ref[...], preferred_element_type=f32)
        + b_attn_ref[...]
    )                                                        # [S, Hp]
    # (6) context dot on VPU (+XLU lane reduce) instead of an N=1 MXU matmul.
    raw = jnp.sum(act * ctx_ref[...], axis=-1, keepdims=True)        # [S, 1]
    m = jnp.max(raw, axis=0, keepdims=True)
    e = jnp.exp(raw - m)
    p = e * pl.reciprocal(jnp.sum(e, axis=0, keepdims=True), approx=True)   # softmax(S)
    hidden = jnp.sum(outputs * p, axis=0, keepdims=True)             # [1, 2*Hd]

    # Match head without broadcast/concat: sec_hidden half becomes a row bias.
    row_bias = (
        jnp.dot(hidden.astype(bf16), w_m2_ref[...], preferred_element_type=f32)
        + b_m_ref[...]
    )                                                        # [1, Lp]
    logits = (
        jnp.dot(fact_ref[...], w_m1_ref[...], preferred_element_type=f32)
        + row_bias
    )                                                        # [B, Lp]
    logits_ref[...] = logits
    scores_ref[...] = jax.nn.sigmoid(logits)


# --------------------------------------------------------------------------------------
# Wrapper: lane-dense / packed-gate zero padding + bf16 weight prep (traced under jit)
# --------------------------------------------------------------------------------------
def _round_up(x, m):
    return (x + m - 1) // m * m


def matchnet_forward(fact_inputs, sec_inputs, params):
    """fact_inputs: [B, H], sec_inputs: [S, H]. Returns (logits, scores), each [B, L]."""
    B, H = fact_inputs.shape
    S = sec_inputs.shape[0]
    Hh = H // 2
    L = params["w_match"].shape[0]
    if 4 * Hh > 128:
        # TODO(synk): general layout (one 128-lane block per gate) for hidden_size > 64.
        raise NotImplementedError("packed-gate kernel requires hidden_size <= 64")

    Hp = _round_up(H, 128)
    Lp = _round_up(L, 128)
    Gd = 128   # per-direction packed gate block (all 4 gates fit in one 128-lane block)
    Hd = 128   # per-direction hidden-state lane block
    f32, bf16 = jnp.float32, jnp.bfloat16

    def pad2(x, rows, cols, dtype):
        r, c = x.shape
        return jnp.pad(x.astype(f32), ((0, rows - r), (0, cols - c))).astype(dtype)

    # Input-to-hidden weights: gates are already consecutive (i,f,g,o) -> plain transpose.
    w_ih_all = jnp.concatenate(
        [pad2(params["w_ih_f"].T, Hp, Gd, bf16),
         pad2(params["w_ih_b"].T, Hp, Gd, bf16)], axis=1)                  # [Hp, 2*Gd]
    b_f = jnp.pad((params["b_ih_f"] + params["b_hh_f"]).astype(f32), (0, Gd - 4 * Hh))
    b_b = jnp.pad((params["b_ih_b"] + params["b_hh_b"]).astype(f32), (0, Gd - 4 * Hh))
    b_all = jnp.concatenate([b_f, b_b]).reshape(1, 2 * Gd)                 # [1, 2*Gd]

    # Block-diagonal hidden-to-hidden weight (fwd top-left, bwd bottom-right).
    w_hh = jnp.zeros((2 * Hd, 2 * Gd), f32)
    w_hh = w_hh.at[0:Hh, 0:4 * Hh].set(params["w_hh_f"].T.astype(f32))
    w_hh = w_hh.at[Hd:Hd + Hh, Gd:Gd + 4 * Hh].set(params["w_hh_b"].T.astype(f32))
    w_hh = w_hh.astype(bf16)                                               # [2*Hd, 2*Gd]

    # Attention weight: input rows are concat(fwd Hh, bwd Hh) -> map to [fwd Hd | bwd Hd].
    w_attn_t = params["w_attn"].T.astype(f32)                              # [2*Hh, H]
    w_attn = jnp.zeros((2 * Hd, Hp), f32)
    w_attn = w_attn.at[0:Hh, 0:H].set(w_attn_t[0:Hh])
    w_attn = w_attn.at[Hd:Hd + Hh, 0:H].set(w_attn_t[Hh:2 * Hh])
    w_attn = w_attn.astype(bf16)                                           # [2*Hd, Hp]
    b_attn = jnp.pad(params["b_attn"].astype(f32), (0, Hp - H)).reshape(1, Hp)
    ctx_row = jnp.pad(params["context"].astype(f32), (0, Hp - H)).reshape(1, Hp)

    # Match head: fact half + sec_hidden half (latter in the [fwd Hd | bwd Hd] layout).
    w_m_t = params["w_match"].T.astype(f32)                                # [2*H, L]
    w_m1 = pad2(w_m_t[:H], Hp, Lp, bf16)                                   # [Hp, Lp]
    w_m2 = jnp.zeros((2 * Hd, Lp), f32)
    w_m2 = w_m2.at[0:Hh, 0:L].set(w_m_t[H:H + Hh])
    w_m2 = w_m2.at[Hd:Hd + Hh, 0:L].set(w_m_t[H + Hh:2 * H])
    w_m2 = w_m2.astype(bf16)                                               # [2*Hd, Lp]
    b_m = jnp.pad(params["b_match"].astype(f32), (0, Lp - L)).reshape(1, Lp)

    fact_p = pad2(fact_inputs, B, Hp, bf16)                                # [B, Hp]
    sec_p = pad2(sec_inputs, S, Hp, bf16)                                  # [S, Hp]

    ins = (fact_p, sec_p, w_ih_all, b_all, w_hh,
           w_attn, b_attn, ctx_row, w_m1, w_m2, b_m)
    vmem = pl.BlockSpec(memory_space=pltpu.MemorySpace.VMEM)

    logits_p, scores_p = pl.pallas_call(
        functools.partial(_matchnet_kernel, hh=Hh),
        out_shape=(jax.ShapeDtypeStruct((B, Lp), f32),
                   jax.ShapeDtypeStruct((B, Lp), f32)),
        in_specs=[vmem] * len(ins),
        out_specs=(vmem, vmem),
        scratch_shapes=[pltpu.VMEM((S, 2 * Gd), f32)],   # hoisted input projections
    )(*ins)
    # Slice lane padding back off (padded score lanes are sigmoid(0)=0.5, discarded).
    return logits_p[:, :L], scores_p[:, :L]


# --------------------------------------------------------------------------------------
# Pure-JAX reference (mirrors the PyTorch forward), full-precision matmuls
# --------------------------------------------------------------------------------------
def matchnet_reference(fact_inputs, sec_inputs, params):
    HI = jax.lax.Precision.HIGHEST
    B, H = fact_inputs.shape
    Hh = H // 2

    def run_dir(w_ih, w_hh, b, reverse):
        def cell(carry, x_t):
            h, c = carry
            gates = (jnp.dot(x_t, w_ih.T, precision=HI)
                     + jnp.dot(h, w_hh.T, precision=HI) + b)
            i = jax.nn.sigmoid(gates[0:Hh])
            f = jax.nn.sigmoid(gates[Hh:2 * Hh])
            g = jnp.tanh(gates[2 * Hh:3 * Hh])
            o = jax.nn.sigmoid(gates[3 * Hh:4 * Hh])
            c = f * c + i * g
            h = o * jnp.tanh(c)
            return (h, c), h

        xs = sec_inputs[::-1] if reverse else sec_inputs
        init = (jnp.zeros((Hh,), jnp.float32), jnp.zeros((Hh,), jnp.float32))
        _, hs = jax.lax.scan(cell, init, xs)
        return hs[::-1] if reverse else hs

    fwd = run_dir(params["w_ih_f"], params["w_hh_f"],
                  params["b_ih_f"] + params["b_hh_f"], False)
    bwd = run_dir(params["w_ih_b"], params["w_hh_b"],
                  params["b_ih_b"] + params["b_hh_b"], True)
    outputs = jnp.concatenate([fwd, bwd], axis=-1)                       # [S, H]

    act = jnp.tanh(jnp.dot(outputs, params["w_attn"].T, precision=HI) + params["b_attn"])
    raw = jnp.dot(act, params["context"], precision=HI)                  # [S]
    p = jax.nn.softmax(raw)
    hidden = jnp.sum(outputs * p[:, None], axis=0)                       # [H]

    cat = jnp.concatenate([fact_inputs, jnp.broadcast_to(hidden, (B, H))], axis=-1)
    logits = jnp.dot(cat, params["w_match"].T, precision=HI) + params["b_match"]
    return logits, jax.nn.sigmoid(logits)


def init_params(key, hidden_size, num_labels):
    H = hidden_size
    Hh = H // 2
    keys = jax.random.split(key, 13)
    u = lambda k, shape, s=0.1: jax.random.uniform(k, shape, jnp.float32, -s, s)
    return {
        # bidirectional LSTM (hidden per direction = H // 2), PyTorch gate order i,f,g,o
        "w_ih_f": u(keys[0], (4 * Hh, H)),
        "w_hh_f": u(keys[1], (4 * Hh, Hh)),
        "b_ih_f": u(keys[2], (4 * Hh,)),
        "b_hh_f": u(keys[3], (4 * Hh,)),
        "w_ih_b": u(keys[4], (4 * Hh, H)),
        "w_hh_b": u(keys[5], (4 * Hh, Hh)),
        "b_ih_b": u(keys[6], (4 * Hh,)),
        "b_hh_b": u(keys[7], (4 * Hh,)),
        # attn_fc + learned context
        "w_attn": u(keys[8], (H, H)),
        "b_attn": u(keys[9], (H,)),
        "context": jax.random.uniform(keys[10], (H,), jnp.float32, 0.0, 1.0),
        # match_fc
        "w_match": u(keys[11], (num_labels, 2 * H)),
        "b_match": u(keys[12], (num_labels,)),
    }


if __name__ == "__main__":
    B, S, H, L = 2, 8, 32, 4

    root = jax.random.PRNGKey(0)
    k_params, k_fact, k_sec = jax.random.split(root, 3)
    params = init_params(k_params, H, L)

    fact_inputs = jax.random.normal(k_fact, (B, H), jnp.float32)
    sec_inputs = jax.random.normal(k_sec, (S, H), jnp.float32)

    logits, scores = jax.jit(functools.partial(matchnet_forward, params=params))(
        fact_inputs, sec_inputs
    )
    jax.block_until_ready((logits, scores))

    ref_logits, ref_scores = matchnet_reference(fact_inputs, sec_inputs, params)

    assert logits.shape == (B, L) and scores.shape == (B, L)
    assert bool(jnp.all(jnp.isfinite(logits))) and bool(jnp.all(jnp.isfinite(scores)))
    assert bool(jnp.all((scores >= 0.0) & (scores <= 1.0)))
    err_logits = float(jnp.max(jnp.abs(logits - ref_logits)))
    err_scores = float(jnp.max(jnp.abs(scores - ref_scores)))
    # bf16 MXU operands (f32 accumulation) vs. Precision.HIGHEST f32 reference.
    assert err_logits < 4e-2 and err_scores < 2e-2, (err_logits, err_scores)
    print("KERNEL_OK")
</pallas_src>

<mosaic_0001>
module attributes {stable_mosaic.version = 11 : i64} {
  func.func @_matchnet_kernel(%arg0: memref<2x128xbf16, #tpu.memory_space<vmem>>, %arg1: memref<8x128xbf16, #tpu.memory_space<vmem>>, %arg2: memref<128x256xbf16, #tpu.memory_space<vmem>>, %arg3: memref<1x256xf32, #tpu.memory_space<vmem>>, %arg4: memref<256x256xbf16, #tpu.memory_space<vmem>>, %arg5: memref<256x128xbf16, #tpu.memory_space<vmem>>, %arg6: memref<1x128xf32, #tpu.memory_space<vmem>>, %arg7: memref<1x128xf32, #tpu.memory_space<vmem>>, %arg8: memref<128x128xbf16, #tpu.memory_space<vmem>>, %arg9: memref<256x128xbf16, #tpu.memory_space<vmem>>, %arg10: memref<1x128xf32, #tpu.memory_space<vmem>>, %arg11: memref<2x128xf32, #tpu.memory_space<vmem>>, %arg12: memref<2x128xf32, #tpu.memory_space<vmem>>, %arg13: memref<8x256xf32, #tpu.memory_space<vmem>>) attributes {dimension_semantics = [], scalar_prefetch = 0 : i64, scratch_operands = 1 : i64, tpu.core_type = #tpu.core_type<tc>} {
    %c0 = arith.constant 0 : index
    %c0_0 = arith.constant 0 : index
    %0 = vector.load %arg1[%c0, %c0_0] : memref<8x128xbf16, #tpu.memory_space<vmem>>, vector<8x128xbf16>
    %c0_1 = arith.constant 0 : index
    %c0_2 = arith.constant 0 : index
    %1 = vector.load %arg2[%c0_1, %c0_2] : memref<128x256xbf16, #tpu.memory_space<vmem>>, vector<128x256xbf16>
    %cst = arith.constant dense<0.000000e+00> : vector<8x256xf32>
    %2 = tpu.matmul %0, %1, %cst {dimension_numbers = #tpu.dot_dimension_numbers<[1], [0], [0], [1], [0, 0, 1, 1], [], []>} : vector<8x128xbf16>, vector<128x256xbf16>, vector<8x256xf32> -> vector<8x256xf32>
    %c0_3 = arith.constant 0 : index
    %c0_4 = arith.constant 0 : index
    %3 = vector.load %arg3[%c0_3, %c0_4] : memref<1x256xf32, #tpu.memory_space<vmem>>, vector<1x256xf32>
    %4 = vector.broadcast %3 : vector<1x256xf32> to vector<8x256xf32>
    %5 = arith.addf %2, %4 : vector<8x256xf32>
    %c0_5 = arith.constant 0 : index
    %c0_6 = arith.constant 0 : index
    %6 = vector.load %arg13[%c0_5, %c0_6] : memref<8x256xf32, #tpu.memory_space<vmem>>, vector<8x256xf32>
    tpu.vector_store %arg13[%c0_5, %c0_6], %5 {strides = array<i32>} : memref<8x256xf32, #tpu.memory_space<vmem>>, vector<8x256xf32>,
    %7 = tpu.iota {dimensions = array<i32: 1>} : vector<1x128xi32>
    %c32_i32 = arith.constant 32 : i32
    %8 = vector.broadcast %c32_i32 : i32 to vector<1x128xi32>
    %9 = arith.cmpi sge, %7, %8 : vector<1x128xi32>
    %c48_i32 = arith.constant 48 : i32
    %10 = vector.broadcast %c48_i32 : i32 to vector<1x128xi32>
    %11 = arith.cmpi slt, %7, %10 : vector<1x128xi32>
    %12 = arith.andi %9, %11 : vector<1x128xi1>
    %cst_7 = arith.constant 0.000000e+00 : f32
    %13 = vector.broadcast %cst_7 : f32 to vector<1x128xf32>
    %cst_8 = arith.constant 0.000000e+00 : f32
    %14 = vector.broadcast %cst_8 : f32 to vector<1x128xf32>
    %c0_9 = arith.constant 0 : index
    %c0_10 = arith.constant 0 : index
    %15 = vector.load %arg13[%c0_9, %c0_10] : memref<8x256xf32, #tpu.memory_space<vmem>>, vector<1x128xf32>
    %c7 = arith.constant 7 : index
    %c128 = arith.constant 128 : index
    %16 = vector.load %arg13[%c7, %c128] : memref<8x256xf32, #tpu.memory_space<vmem>>, vector<1x128xf32>
    %17 = math.tanh %15 : vector<1x128xf32>
    %18 = arith.negf %15 : vector<1x128xf32>
    %19 = math.exp %18 : vector<1x128xf32>
    %cst_11 = arith.constant 1.000000e+00 : f32
    %20 = vector.broadcast %cst_11 : f32 to vector<1x128xf32>
    %21 = arith.addf %20, %19 : vector<1x128xf32>
    %22 = arith.divf %20, %21 : vector<1x128xf32>
    %23 = arith.select %12, %17, %22 : vector<1x128xi1>, vector<1x128xf32>
    %c112_i32 = arith.constant 112 : i32
    %24 = tpu.dynamic_rotate %23 by %c112_i32 dim 1 : vector<1x128xf32>, i32 -> vector<1x128xf32>
    %c96_i32 = arith.constant 96 : i32
    %25 = tpu.dynamic_rotate %23 by %c96_i32 dim 1 : vector<1x128xf32>, i32 -> vector<1x128xf32>
    %c80_i32 = arith.constant 80 : i32
    %26 = tpu.dynamic_rotate %23 by %c80_i32 dim 1 : vector<1x128xf32>, i32 -> vector<1x128xf32>
    %27 = arith.mulf %24, %13 : vector<1x128xf32>
    %28 = arith.mulf %23, %25 : vector<1x128xf32>
    %29 = arith.addf %27, %28 : vector<1x128xf32>
    %30 = math.tanh %29 : vector<1x128xf32>
    %31 = arith.mulf %26, %30 : vector<1x128xf32>
    %32 = math.tanh %16 : vector<1x128xf32>
    %33 = arith.negf %16 : vector<1x128xf32>
    %34 = math.exp %33 : vector<1x128xf32>
    %cst_12 = arith.constant 1.000000e+00 : f32
    %35 = vector.broadcast %cst_12 : f32 to vector<1x128xf32>
    %36 = arith.addf %35, %34 : vector<1x128xf32>
    %37 = arith.divf %35, %36 : vector<1x128xf32>
    %38 = arith.select %12, %32, %37 : vector<1x128xi1>, vector<1x128xf32>
    %c112_i32_13 = arith.constant 112 : i32
    %39 = tpu.dynamic_rotate %38 by %c112_i32_13 dim 1 : vector<1x128xf32>, i32 -> vector<1x128xf32>
    %c96_i32_14 = arith.constant 96 : i32
    %40 = tpu.dynamic_rotate %38 by %c96_i32_14 dim 1 : vector<1x128xf32>, i32 -> vector<1x128xf32>
    %c80_i32_15 = arith.constant 80 : i32
    %41 = tpu.dynamic_rotate %38 by %c80_i32_15 dim 1 : vector<1x128xf32>, i32 -> vector<1x128xf32>
    %42 = arith.mulf %39, %14 : vector<1x128xf32>
    %43 = arith.mulf %38, %40 : vector<1x128xf32>
    %44 = arith.addf %42, %43 : vector<1x128xf32>
    %45 = math.tanh %44 : vector<1x128xf32>
    %46 = arith.mulf %41, %45 : vector<1x128xf32>
    %47 = tpu.concatenate %31, %46 in 1 : vector<1x128xf32>, vector<1x128xf32> -> vector<1x256xf32>
    %48 = arith.truncf %47 : vector<1x256xf32> to vector<1x256xbf16>
    %c0_16 = arith.constant 0 : index
    %c0_17 = arith.constant 0 : index
    %49 = vector.load %arg4[%c0_16, %c0_17] : memref<256x256xbf16, #tpu.memory_space<vmem>>, vector<256x256xbf16>
    %cst_18 = arith.constant dense<0.000000e+00> : vector<1x256xf32>
    %50 = tpu.matmul %48, %49, %cst_18 {dimension_numbers = #tpu.dot_dimension_numbers<[1], [0], [0], [1], [0, 0, 1, 1], [], []>} : vector<1x256xbf16>, vector<256x256xbf16>, vector<1x256xf32> -> vector<1x256xf32>
    %c1 = arith.constant 1 : index
    %c0_19 = arith.constant 0 : index
    %51 = vector.load %arg13[%c1, %c0_19] : memref<8x256xf32, #tpu.memory_space<vmem>>, vector<1x128xf32>
    %52 = vector.extract_strided_slice %50 {offsets = [0, 0], sizes = [1, 128], strides = [1, 1]} : vector<1x256xf32> to vector<1x128xf32>
    %53 = arith.addf %51, %52 : vector<1x128xf32>
    %c6 = arith.constant 6 : index
    %c128_20 = arith.constant 128 : index
    %54 = vector.load %arg13[%c6, %c128_20] : memref<8x256xf32, #tpu.memory_space<vmem>>, vector<1x128xf32>
    %55 = vector.extract_strided_slice %50 {offsets = [0, 128], sizes = [1, 128], strides = [1, 1]} : vector<1x256xf32> to vector<1x128xf32>
    %56 = arith.addf %54, %55 : vector<1x128xf32>
    %57 = math.tanh %53 : vector<1x128xf32>
    %58 = arith.negf %53 : vector<1x128xf32>
    %59 = math.exp %58 : vector<1x128xf32>
    %cst_21 = arith.constant 1.000000e+00 : f32
    %60 = vector.broadcast %cst_21 : f32 to vector<1x128xf32>
    %61 = arith.addf %60, %59 : vector<1x128xf32>
    %62 = arith.divf %60, %61 : vector<1x128xf32>
    %63 = arith.select %12, %57, %62 : vector<1x128xi1>, vector<1x128xf32>
    %c112_i32_22 = arith.constant 112 : i32
    %64 = tpu.dynamic_rotate %63 by %c112_i32_22 dim 1 : vector<1x128xf32>, i32 -> vector<1x128xf32>
    %c96_i32_23 = arith.constant 96 : i32
    %65 = tpu.dynamic_rotate %63 by %c96_i32_23 dim 1 : vector<1x128xf32>, i32 -> vector<1x128xf32>
    %c80_i32_24 = arith.constant 80 : i32
    %66 = tpu.dynamic_rotate %63 by %c80_i32_24 dim 1 : vector<1x128xf32>, i32 -> vector<1x128xf32>
    %67 = arith.mulf %64, %29 : vector<1x128xf32>
    %68 = arith.mulf %63, %65 : vector<1x128xf32>
    %69 = arith.addf %67, %68 : vector<1x128xf32>
    %70 = math.tanh %69 : vector<1x128xf32>
    %71 = arith.mulf %66, %70 : vector<1x128xf32>
    %72 = math.tanh %56 : vector<1x128xf32>
    %73 = arith.negf %56 : vector<1x128xf32>
    %74 = math.exp %73 : vector<1x128xf32>
    %cst_25 = arith.constant 1.000000e+00 : f32
    %75 = vector.broadcast %cst_25 : f32 to vector<1x128xf32>
    %76 = arith.addf %75, %74 : vector<1x128xf32>
    %77 = arith.divf %75, %76 : vector<1x128xf32>
    %78 = arith.select %12, %72, %77 : vector<1x128xi1>, vector<1x128xf32>
    %c112_i32_26 = arith.constant 112 : i32
    %79 = tpu.dynamic_rotate %78 by %c112_i32_26 dim 1 : vector<1x128xf32>, i32 -> vector<1x128xf32>
    %c96_i32_27 = arith.constant 96 : i32
    %80 = tpu.dynamic_rotate %78 by %c96_i32_27 dim 1 : vector<1x128xf32>, i32 -> vector<1x128xf32>
    %c80_i32_28 = arith.constant 80 : i32
    %81 = tpu.dynamic_rotate %78 by %c80_i32_28 dim 1 : vector<1x128xf32>, i32 -> vector<1x128xf32>
    %82 = arith.mulf %79, %44 : vector<1x128xf32>
    %83 = arith.mulf %78, %80 : vector<1x128xf32>
    %84 = arith.addf %82, %83 : vector<1x128xf32>
    %85 = math.tanh %84 : vector<1x128xf32>
    %86 = arith.mulf %81, %85 : vector<1x128xf32>
    %87 = tpu.concatenate %71, %86 in 1 : vector<1x128xf32>, vector<1x128xf32> -> vector<1x256xf32>
    %88 = arith.truncf %87 : vector<1x256xf32> to vector<1x256xbf16>
    %c0_29 = arith.constant 0 : index
    %c0_30 = arith.constant 0 : index
    %89 = vector.load %arg4[%c0_29, %c0_30] : memref<256x256xbf16, #tpu.memory_space<vmem>>, vector<256x256xbf16>
    %cst_31 = arith.constant dense<0.000000e+00> : vector<1x256xf32>
    %90 = tpu.matmul %88, %89, %cst_31 {dimension_numbers = #tpu.dot_dimension_numbers<[1], [0], [0], [1], [0, 0, 1, 1], [], []>} : vector<1x256xbf16>, vector<256x256xbf16>, vector<1x256xf32> -> vector<1x256xf32>
    %c2 = arith.constant 2 : index
    %c0_32 = arith.constant 0 : index
    %91 = vector.load %arg13[%c2, %c0_32] : memref<8x256xf32, #tpu.memory_space<vmem>>, vector<1x128xf32>
    %92 = vector.extract_strided_slice %90 {offsets = [0, 0], sizes = [1, 128], strides = [1, 1]} : vector<1x256xf32> to vector<1x128xf32>
    %93 = arith.addf %91, %92 : vector<1x128xf32>
    %c5 = arith.constant 5 : index
    %c128_33 = arith.constant 128 : index
    %94 = vector.load %arg13[%c5, %c128_33] : memref<8x256xf32, #tpu.memory_space<vmem>>, vector<1x128xf32>
    %95 = vector.extract_strided_slice %90 {offsets = [0, 128], sizes = [1, 128], strides = [1, 1]} : vector<1x256xf32> to vector<1x128xf32>
    %96 = arith.addf %94, %95 : vector<1x128xf32>
    %97 = math.tanh %93 : vector<1x128xf32>
    %98 = arith.negf %93 : vector<1x128xf32>
    %99 = math.exp %98 : vector<1x128xf32>
    %cst_34 = arith.constant 1.000000e+00 : f32
    %100 = vector.broadcast %cst_34 : f32 to vector<1x128xf32>
    %101 = arith.addf %100, %99 : vector<1x128xf32>
    %102 = arith.divf %100, %101 : vector<1x128xf32>
    %103 = arith.select %12, %97, %102 : vector<1x128xi1>, vector<1x128xf32>
    %c112_i32_35 = arith.constant 112 : i32
    %104 = tpu.dynamic_rotate %103 by %c112_i32_35 dim 1 : vector<1x128xf32>, i32 -> vector<1x128xf32>
    %c96_i32_36 = arith.constant 96 : i32
    %105 = tpu.dynamic_rotate %103 by %c96_i32_36 dim 1 : vector<1x128xf32>, i32 -> vector<1x128xf32>
    %c80_i32_37 = arith.constant 80 : i32
    %106 = tpu.dynamic_rotate %103 by %c80_i32_37 dim 1 : vector<1x128xf32>, i32 -> vector<1x128xf32>
    %107 = arith.mulf %104, %69 : vector<1x128xf32>
    %108 = arith.mulf %103, %105 : vector<1x128xf32>
    %109 = arith.addf %107, %108 : vector<1x128xf32>
    %110 = math.tanh %109 : vector<1x128xf32>
    %111 = arith.mulf %106, %110 : vector<1x128xf32>
    %112 = math.tanh %96 : vector<1x128xf32>
    %113 = arith.negf %96 : vector<1x128xf32>
    %114 = math.exp %113 : vector<1x128xf32>
    %cst_38 = arith.constant 1.000000e+00 : f32
    %115 = vector.broadcast %cst_38 : f32 to vector<1x128xf32>
    %116 = arith.addf %115, %114 : vector<1x128xf32>
    %117 = arith.divf %115, %116 : vector<1x128xf32>
    %118 = arith.select %12, %112, %117 : vector<1x128xi1>, vector<1x128xf32>
    %c112_i32_39 = arith.constant 112 : i32
    %119 = tpu.dynamic_rotate %118 by %c112_i32_39 dim 1 : vector<1x128xf32>, i32 -> vector<1x128xf32>
    %c96_i32_40 = arith.constant 96 : i32
    %120 = tpu.dynamic_rotate %118 by %c96_i32_40 dim 1 : vector<1x128xf32>, i32 -> vector<1x128xf32>
    %c80_i32_41 = arith.constant 80 : i32
    %121 = tpu.dynamic_rotate %118 by %c80_i32_41 dim 1 : vector<1x128xf32>, i32 -> vector<1x128xf32>
    %122 = arith.mulf %119, %84 : vector<1x128xf32>
    %123 = arith.mulf %118, %120 : vector<1x128xf32>
    %124 = arith.addf %122, %123 : vector<1x128xf32>
    %125 = math.tanh %124 : vector<1x128xf32>
    %126 = arith.mulf %121, %125 : vector<1x128xf32>
    %127 = tpu.concatenate %111, %126 in 1 : vector<1x128xf32>, vector<1x128xf32> -> vector<1x256xf32>
    %128 = arith.truncf %127 : vector<1x256xf32> to vector<1x256xbf16>
    %c0_42 = arith.constant 0 : index
    %c0_43 = arith.constant 0 : index
    %129 = vector.load %arg4[%c0_42, %c0_43] : memref<256x256xbf16, #tpu.memory_space<vmem>>, vector<256x256xbf16>
    %cst_44 = arith.constant dense<0.000000e+00> : vector<1x256xf32>
    %130 = tpu.matmul %128, %129, %cst_44 {dimension_numbers = #tpu.dot_dimension_numbers<[1], [0], [0], [1], [0, 0, 1, 1], [], []>} : vector<1x256xbf16>, vector<256x256xbf16>, vector<1x256xf32> -> vector<1x256xf32>
    %c3 = arith.constant 3 : index
    %c0_45 = arith.constant 0 : index
    %131 = vector.load %arg13[%c3, %c0_45] : memref<8x256xf32, #tpu.memory_space<vmem>>, vector<1x128xf32>
    %132 = vector.extract_strided_slice %130 {offsets = [0, 0], sizes = [1, 128], strides = [1, 1]} : vector<1x256xf32> to vector<1x128xf32>
    %133 = arith.addf %131, %132 : vector<1x128xf32>
    %c4 = arith.constant 4 : index
    %c128_46 = arith.constant 128 : index
    %134 = vector.load %arg13[%c4, %c128_46] : memref<8x256xf32, #tpu.memory_space<vmem>>, vector<1x128xf32>
    %135 = vector.extract_strided_slice %130 {offsets = [0, 128], sizes = [1, 128], strides = [1, 1]} : vector<1x256xf32> to vector<1x128xf32>
    %136 = arith.addf %134, %135 : vector<1x128xf32>
    %137 = math.tanh %133 : vector<1x128xf32>
    %138 = arith.negf %133 : vector<1x128xf32>
    %139 = math.exp %138 : vector<1x128xf32>
    %cst_47 = arith.constant 1.000000e+00 : f32
    %140 = vector.broadcast %cst_47 : f32 to vector<1x128xf32>
    %141 = arith.addf %140, %139 : vector<1x128xf32>
    %142 = arith.divf %140, %141 : vector<1x128xf32>
    %143 = arith.select %12, %137, %142 : vector<1x128xi1>, vector<1x128xf32>
    %c112_i32_48 = arith.constant 112 : i32
    %144 = tpu.dynamic_rotate %143 by %c112_i32_48 dim 1 : vector<1x128xf32>, i32 -> vector<1x128xf32>
    %c96_i32_49 = arith.constant 96 : i32
    %145 = tpu.dynamic_rotate %143 by %c96_i32_49 dim 1 : vector<1x128xf32>, i32 -> vector<1x128xf32>
    %c80_i32_50 = arith.constant 80 : i32
    %146 = tpu.dynamic_rotate %143 by %c80_i32_50 dim 1 : vector<1x128xf32>, i32 -> vector<1x128xf32>
    %147 = arith.mulf %144, %109 : vector<1x128xf32>
    %148 = arith.mulf %143, %145 : vector<1x128xf32>
    %149 = arith.addf %147, %148 : vector<1x128xf32>
    %150 = math.tanh %149 : vector<1x128xf32>
    %151 = arith.mulf %146, %150 : vector<1x128xf32>
    %152 = math.tanh %136 : vector<1x128xf32>
    %153 = arith.negf %136 : vector<1x128xf32>
    %154 = math.exp %153 : vector<1x128xf32>
    %cst_51 = arith.constant 1.000000e+00 : f32
    %155 = vector.broadcast %cst_51 : f32 to vector<1x128xf32>
    %156 = arith.addf %155, %154 : vector<1x128xf32>
    %157 = arith.divf %155, %156 : vector<1x128xf32>
    %158 = arith.select %12, %152, %157 : vector<1x128xi1>, vector<1x128xf32>
    %c112_i32_52 = arith.constant 112 : i32
    %159 = tpu.dynamic_rotate %158 by %c112_i32_52 dim 1 : vector<1x128xf32>, i32 -> vector<1x128xf32>
    %c96_i32_53 = arith.constant 96 : i32
    %160 = tpu.dynamic_rotate %158 by %c96_i32_53 dim 1 : vector<1x128xf32>, i32 -> vector<1x128xf32>
    %c80_i32_54 = arith.constant 80 : i32
    %161 = tpu.dynamic_rotate %158 by %c80_i32_54 dim 1 : vector<1x128xf32>, i32 -> vector<1x128xf32>
    %162 = arith.mulf %159, %124 : vector<1x128xf32>
    %163 = arith.mulf %158, %160 : vector<1x128xf32>
    %164 = arith.addf %162, %163 : vector<1x128xf32>
    %165 = math.tanh %164 : vector<1x128xf32>
    %166 = arith.mulf %161, %165 : vector<1x128xf32>
    %167 = tpu.concatenate %151, %166 in 1 : vector<1x128xf32>, vector<1x128xf32> -> vector<1x256xf32>
    %168 = arith.truncf %167 : vector<1x256xf32> to vector<1x256xbf16>
    %c0_55 = arith.constant 0 : index
    %c0_56 = arith.constant 0 : index
    %169 = vector.load %arg4[%c0_55, %c0_56] : memref<256x256xbf16, #tpu.memory_space<vmem>>, vector<256x256xbf16>
    %cst_57 = arith.constant dense<0.000000e+00> : vector<1x256xf32>
    %170 = tpu.matmul %168, %169, %cst_57 {dimension_numbers = #tpu.dot_dimension_numbers<[1], [0], [0], [1], [0, 0, 1, 1], [], []>} : vector<1x256xbf16>, vector<256x256xbf16>, vector<1x256xf32> -> vector<1x256xf32>
    %c4_58 = arith.constant 4 : index
    %c0_59 = arith.constant 0 : index
    %171 = vector.load %arg13[%c4_58, %c0_59] : memref<8x256xf32, #tpu.memory_space<vmem>>, vector<1x128xf32>
    %172 = vector.extract_strided_slice %170 {offsets = [0, 0], sizes = [1, 128], strides = [1, 1]} : vector<1x256xf32> to vector<1x128xf32>
    %173 = arith.addf %171, %172 : vector<1x128xf32>
    %c3_60 = arith.constant 3 : index
    %c128_61 = arith.constant 128 : index
    %174 = vector.load %arg13[%c3_60, %c128_61] : memref<8x256xf32, #tpu.memory_space<vmem>>, vector<1x128xf32>
    %175 = vector.extract_strided_slice %170 {offsets = [0, 128], sizes = [1, 128], strides = [1, 1]} : vector<1x256xf32> to vector<1x128xf32>
    %176 = arith.addf %174, %175 : vector<1x128xf32>
    %177 = math.tanh %173 : vector<1x128xf32>
    %178 = arith.negf %173 : vector<1x128xf32>
    %179 = math.exp %178 : vector<1x128xf32>
    %cst_62 = arith.constant 1.000000e+00 : f32
    %180 = vector.broadcast %cst_62 : f32 to vector<1x128xf32>
    %181 = arith.addf %180, %179 : vector<1x128xf32>
    %182 = arith.divf %180, %181 : vector<1x128xf32>
    %183 = arith.select %12, %177, %182 : vector<1x128xi1>, vector<1x128xf32>
    %c112_i32_63 = arith.constant 112 : i32
    %184 = tpu.dynamic_rotate %183 by %c112_i32_63 dim 1 : vector<1x128xf32>, i32 -> vector<1x128xf32>
    %c96_i32_64 = arith.constant 96 : i32
    %185 = tpu.dynamic_rotate %183 by %c96_i32_64 dim 1 : vector<1x128xf32>, i32 -> vector<1x128xf32>
    %c80_i32_65 = arith.constant 80 : i32
    %186 = tpu.dynamic_rotate %183 by %c80_i32_65 dim 1 : vector<1x128xf32>, i32 -> vector<1x128xf32>
    %187 = arith.mulf %184, %149 : vector<1x128xf32>
    %188 = arith.mulf %183, %185 : vector<1x128xf32>
    %189 = arith.addf %187, %188 : vector<1x128xf32>
    %190 = math.tanh %189 : vector<1x128xf32>
    %191 = arith.mulf %186, %190 : vector<1x128xf32>
    %192 = math.tanh %176 : vector<1x128xf32>
    %193 = arith.negf %176 : vector<1x128xf32>
    %194 = math.exp %193 : vector<1x128xf32>
    %cst_66 = arith.constant 1.000000e+00 : f32
    %195 = vector.broadcast %cst_66 : f32 to vector<1x128xf32>
    %196 = arith.addf %195, %194 : vector<1x128xf32>
    %197 = arith.divf %195, %196 : vector<1x128xf32>
    %198 = arith.select %12, %192, %197 : vector<1x128xi1>, vector<1x128xf32>
    %c112_i32_67 = arith.constant 112 : i32
    %199 = tpu.dynamic_rotate %198 by %c112_i32_67 dim 1 : vector<1x128xf32>, i32 -> vector<1x128xf32>
    %c96_i32_68 = arith.constant 96 : i32
    %200 = tpu.dynamic_rotate %198 by %c96_i32_68 dim 1 : vector<1x128xf32>, i32 -> vector<1x128xf32>
    %c80_i32_69 = arith.constant 80 : i32
    %201 = tpu.dynamic_rotate %198 by %c80_i32_69 dim 1 : vector<1x128xf32>, i32 -> vector<1x128xf32>
    %202 = arith.mulf %199, %164 : vector<1x128xf32>
    %203 = arith.mulf %198, %200 : vector<1x128xf32>
    %204 = arith.addf %202, %203 : vector<1x128xf32>
    %205 = math.tanh %204 : vector<1x128xf32>
    %206 = arith.mulf %201, %205 : vector<1x128xf32>
    %207 = tpu.concatenate %191, %206 in 1 : vector<1x128xf32>, vector<1x128xf32> -> vector<1x256xf32>
    %208 = arith.truncf %207 : vector<1x256xf32> to vector<1x256xbf16>
    %c0_70 = arith.constant 0 : index
    %c0_71 = arith.constant 0 : index
    %209 = vector.load %arg4[%c0_70, %c0_71] : memref<256x256xbf16, #tpu.memory_space<vmem>>, vector<256x256xbf16>
    %cst_72 = arith.constant dense<0.000000e+00> : vector<1x256xf32>
    %210 = tpu.matmul %208, %209, %cst_72 {dimension_numbers = #tpu.dot_dimension_numbers<[1], [0], [0], [1], [0, 0, 1, 1], [], []>} : vector<1x256xbf16>, vector<256x256xbf16>, vector<1x256xf32> -> vector<1x256xf32>
    %c5_73 = arith.constant 5 : index
    %c0_74 = arith.constant 0 : index
    %211 = vector.load %arg13[%c5_73, %c0_74] : memref<8x256xf32, #tpu.memory_space<vmem>>, vector<1x128xf32>
    %212 = vector.extract_strided_slice %210 {offsets = [0, 0], sizes = [1, 128], strides = [1, 1]} : vector<1x256xf32> to vector<1x128xf32>
    %213 = arith.addf %211, %212 : vector<1x128xf32>
    %c2_75 = arith.constant 2 : index
    %c128_76 = arith.constant 128 : index
    %214 = vector.load %arg13[%c2_75, %c128_76] : memref<8x256xf32, #tpu.memory_space<vmem>>, vector<1x128xf32>
    %215 = vector.extract_strided_slice %210 {offsets = [0, 128], sizes = [1, 128], strides = [1, 1]} : vector<1x256xf32> to vector<1x128xf32>
    %216 = arith.addf %214, %215 : vector<1x128xf32>
    %217 = math.tanh %213 : vector<1x128xf32>
    %218 = arith.negf %213 : vector<1x128xf32>
    %219 = math.exp %218 : vector<1x128xf32>
    %cst_77 = arith.constant 1.000000e+00 : f32
    %220 = vector.broadcast %cst_77 : f32 to vector<1x128xf32>
    %221 = arith.addf %220, %219 : vector<1x128xf32>
    %222 = arith.divf %220, %221 : vector<1x128xf32>
    %223 = arith.select %12, %217, %222 : vector<1x128xi1>, vector<1x128xf32>
    %c112_i32_78 = arith.constant 112 : i32
    %224 = tpu.dynamic_rotate %223 by %c112_i32_78 dim 1 : vector<1x128xf32>, i32 -> vector<1x128xf32>
    %c96_i32_79 = arith.constant 96 : i32
    %225 = tpu.dynamic_rotate %223 by %c96_i32_79 dim 1 : vector<1x128xf32>, i32 -> vector<1x128xf32>
    %c80_i32_80 = arith.constant 80 : i32
    %226 = tpu.dynamic_rotate %223 by %c80_i32_80 dim 1 : vector<1x128xf32>, i32 -> vector<1x128xf32>
    %227 = arith.mulf %224, %189 : vector<1x128xf32>
    %228 = arith.mulf %223, %225 : vector<1x128xf32>
    %229 = arith.addf %227, %228 : vector<1x128xf32>
    %230 = math.tanh %229 : vector<1x128xf32>
    %231 = arith.mulf %226, %230 : vector<1x128xf32>
    %232 = math.tanh %216 : vector<1x128xf32>
    %233 = arith.negf %216 : vector<1x128xf32>
    %234 = math.exp %233 : vector<1x128xf32>
    %cst_81 = arith.constant 1.000000e+00 : f32
    %235 = vector.broadcast %cst_81 : f32 to vector<1x128xf32>
    %236 = arith.addf %235, %234 : vector<1x128xf32>
    %237 = arith.divf %235, %236 : vector<1x128xf32>
    %238 = arith.select %12, %232, %237 : vector<1x128xi1>, vector<1x128xf32>
    %c112_i32_82 = arith.constant 112 : i32
    %239 = tpu.dynamic_rotate %238 by %c112_i32_82 dim 1 : vector<1x128xf32>, i32 -> vector<1x128xf32>
    %c96_i32_83 = arith.constant 96 : i32
    %240 = tpu.dynamic_rotate %238 by %c96_i32_83 dim 1 : vector<1x128xf32>, i32 -> vector<1x128xf32>
    %c80_i32_84 = arith.constant 80 : i32
    %241 = tpu.dynamic_rotate %238 by %c80_i32_84 dim 1 : vector<1x128xf32>, i32 -> vector<1x128xf32>
    %242 = arith.mulf %239, %204 : vector<1x128xf32>
    %243 = arith.mulf %238, %240 : vector<1x128xf32>
    %244 = arith.addf %242, %243 : vector<1x128xf32>
    %245 = math.tanh %244 : vector<1x128xf32>
    %246 = arith.mulf %241, %245 : vector<1x128xf32>
    %247 = tpu.concatenate %231, %246 in 1 : vector<1x128xf32>, vector<1x128xf32> -> vector<1x256xf32>
    %248 = arith.truncf %247 : vector<1x256xf32> to vector<1x256xbf16>
    %c0_85 = arith.constant 0 : index
    %c0_86 = arith.constant 0 : index
    %249 = vector.load %arg4[%c0_85, %c0_86] : memref<256x256xbf16, #tpu.memory_space<vmem>>, vector<256x256xbf16>
    %cst_87 = arith.constant dense<0.000000e+00> : vector<1x256xf32>
    %250 = tpu.matmul %248, %249, %cst_87 {dimension_numbers = #tpu.dot_dimension_numbers<[1], [0], [0], [1], [0, 0, 1, 1], [], []>} : vector<1x256xbf16>, vector<256x256xbf16>, vector<1x256xf32> -> vector<1x256xf32>
    %c6_88 = arith.constant 6 : index
    %c0_89 = arith.constant 0 : index
    %251 = vector.load %arg13[%c6_88, %c0_89] : memref<8x256xf32, #tpu.memory_space<vmem>>, vector<1x128xf32>
    %252 = vector.extract_strided_slice %250 {offsets = [0, 0], sizes = [1, 128], strides = [1, 1]} : vector<1x256xf32> to vector<1x128xf32>
    %253 = arith.addf %251, %252 : vector<1x128xf32>
    %c1_90 = arith.constant 1 : index
    %c128_91 = arith.constant 128 : index
    %254 = vector.load %arg13[%c1_90, %c128_91] : memref<8x256xf32, #tpu.memory_space<vmem>>, vector<1x128xf32>
    %255 = vector.extract_strided_slice %250 {offsets = [0, 128], sizes = [1, 128], strides = [1, 1]} : vector<1x256xf32> to vector<1x128xf32>
    %256 = arith.addf %254, %255 : vector<1x128xf32>
    %257 = math.tanh %253 : vector<1x128xf32>
    %258 = arith.negf %253 : vector<1x128xf32>
    %259 = math.exp %258 : vector<1x128xf32>
    %cst_92 = arith.constant 1.000000e+00 : f32
    %260 = vector.broadcast %cst_92 : f32 to vector<1x128xf32>
    %261 = arith.addf %260, %259 : vector<1x128xf32>
    %262 = arith.divf %260, %261 : vector<1x128xf32>
    %263 = arith.select %12, %257, %262 : vector<1x128xi1>, vector<1x128xf32>
    %c112_i32_93 = arith.constant 112 : i32
    %264 = tpu.dynamic_rotate %263 by %c112_i32_93 dim 1 : vector<1x128xf32>, i32 -> vector<1x128xf32>
    %c96_i32_94 = arith.constant 96 : i32
    %265 = tpu.dynamic_rotate %263 by %c96_i32_94 dim 1 : vector<1x128xf32>, i32 -> vector<1x128xf32>
    %c80_i32_95 = arith.constant 80 : i32
    %266 = tpu.dynamic_rotate %263 by %c80_i32_95 dim 1 : vector<1x128xf32>, i32 -> vector<1x128xf32>
    %267 = arith.mulf %264, %229 : vector<1x128xf32>
    %268 = arith.mulf %263, %265 : vector<1x128xf32>
    %269 = arith.addf %267, %268 : vector<1x128xf32>
    %270 = math.tanh %269 : vector<1x128xf32>
    %271 = arith.mulf %266, %270 : vector<1x128xf32>
    %272 = math.tanh %256 : vector<1x128xf32>
    %273 = arith.negf %256 : vector<1x128xf32>
    %274 = math.exp %273 : vector<1x128xf32>
    %cst_96 = arith.constant 1.000000e+00 : f32
    %275 = vector.broadcast %cst_96 : f32 to vector<1x128xf32>
    %276 = arith.addf %275, %274 : vector<1x128xf32>
    %277 = arith.divf %275, %276 : vector<1x128xf32>
    %278 = arith.select %12, %272, %277 : vector<1x128xi1>, vector<1x128xf32>
    %c112_i32_97 = arith.constant 112 : i32
    %279 = tpu.dynamic_rotate %278 by %c112_i32_97 dim 1 : vector<1x128xf32>, i32 -> vector<1x128xf32>
    %c96_i32_98 = arith.constant 96 : i32
    %280 = tpu.dynamic_rotate %278 by %c96_i32_98 dim 1 : vector<1x128xf32>, i32 -> vector<1x128xf32>
    %c80_i32_99 = arith.constant 80 : i32
    %281 = tpu.dynamic_rotate %278 by %c80_i32_99 dim 1 : vector<1x128xf32>, i32 -> vector<1x128xf32>
    %282 = arith.mulf %279, %244 : vector<1x128xf32>
    %283 = arith.mulf %278, %280 : vector<1x128xf32>
    %284 = arith.addf %282, %283 : vector<1x128xf32>
    %285 = math.tanh %284 : vector<1x128xf32>
    %286 = arith.mulf %281, %285 : vector<1x128xf32>
    %287 = tpu.concatenate %271, %286 in 1 : vector<1x128xf32>, vector<1x128xf32> -> vector<1x256xf32>
    %288 = arith.truncf %287 : vector<1x256xf32> to vector<1x256xbf16>
    %c0_100 = arith.constant 0 : index
    %c0_101 = arith.constant 0 : index
    %289 = vector.load %arg4[%c0_100, %c0_101] : memref<256x256xbf16, #tpu.memory_space<vmem>>, vector<256x256xbf16>
    %cst_102 = arith.constant dense<0.000000e+00> : vector<1x256xf32>
    %290 = tpu.matmul %288, %289, %cst_102 {dimension_numbers = #tpu.dot_dimension_numbers<[1], [0], [0], [1], [0, 0, 1, 1], [], []>} : vector<1x256xbf16>, vector<256x256xbf16>, vector<1x256xf32> -> vector<1x256xf32>
    %c7_103 = arith.constant 7 : index
    %c0_104 = arith.constant 0 : index
    %291 = vector.load %arg13[%c7_103, %c0_104] : memref<8x256xf32, #tpu.memory_space<vmem>>, vector<1x128xf32>
    %292 = vector.extract_strided_slice %290 {offsets = [0, 0], sizes = [1, 128], strides = [1, 1]} : vector<1x256xf32> to vector<1x128xf32>
    %293 = arith.addf %291, %292 : vector<1x128xf32>
    %c0_105 = arith.constant 0 : index
    %c128_106 = arith.constant 128 : index
    %294 = vector.load %arg13[%c0_105, %c128_106] : memref<8x256xf32, #tpu.memory_space<vmem>>, vector<1x128xf32>
    %295 = vector.extract_strided_slice %290 {offsets = [0, 128], sizes = [1, 128], strides = [1, 1]} : vector<1x256xf32> to vector<1x128xf32>
    %296 = arith.addf %294, %295 : vector<1x128xf32>
    %297 = math.tanh %293 : vector<1x128xf32>
    %298 = arith.negf %293 : vector<1x128xf32>
    %299 = math.exp %298 : vector<1x128xf32>
    %cst_107 = arith.constant 1.000000e+00 : f32
    %300 = vector.broadcast %cst_107 : f32 to vector<1x128xf32>
    %301 = arith.addf %300, %299 : vector<1x128xf32>
    %302 = arith.divf %300, %301 : vector<1x128xf32>
    %303 = arith.select %12, %297, %302 : vector<1x128xi1>, vector<1x128xf32>
    %c112_i32_108 = arith.constant 112 : i32
    %304 = tpu.dynamic_rotate %303 by %c112_i32_108 dim 1 : vector<1x128xf32>, i32 -> vector<1x128xf32>
    %c96_i32_109 = arith.constant 96 : i32
    %305 = tpu.dynamic_rotate %303 by %c96_i32_109 dim 1 : vector<1x128xf32>, i32 -> vector<1x128xf32>
    %c80_i32_110 = arith.constant 80 : i32
    %306 = tpu.dynamic_rotate %303 by %c80_i32_110 dim 1 : vector<1x128xf32>, i32 -> vector<1x128xf32>
    %307 = arith.mulf %304, %269 : vector<1x128xf32>
    %308 = arith.mulf %303, %305 : vector<1x128xf32>
    %309 = arith.addf %307, %308 : vector<1x128xf32>
    %310 = math.tanh %309 : vector<1x128xf32>
    %311 = arith.mulf %306, %310 : vector<1x128xf32>
    %312 = math.tanh %296 : vector<1x128xf32>
    %313 = arith.negf %296 : vector<1x128xf32>
    %314 = math.exp %313 : vector<1x128xf32>
    %cst_111 = arith.constant 1.000000e+00 : f32
    %315 = vector.broadcast %cst_111 : f32 to vector<1x128xf32>
    %316 = arith.addf %315, %314 : vector<1x128xf32>
    %317 = arith.divf %315, %316 : vector<1x128xf32>
    %318 = arith.select %12, %312, %317 : vector<1x128xi1>, vector<1x128xf32>
    %c112_i32_112 = arith.constant 112 : i32
    %319 = tpu.dynamic_rotate %318 by %c112_i32_112 dim 1 : vector<1x128xf32>, i32 -> vector<1x128xf32>
    %c96_i32_113 = arith.constant 96 : i32
    %320 = tpu.dynamic_rotate %318 by %c96_i32_113 dim 1 : vector<1x128xf32>, i32 -> vector<1x128xf32>
    %c80_i32_114 = arith.constant 80 : i32
    %321 = tpu.dynamic_rotate %318 by %c80_i32_114 dim 1 : vector<1x128xf32>, i32 -> vector<1x128xf32>
    %322 = arith.mulf %319, %284 : vector<1x128xf32>
    %323 = arith.mulf %318, %320 : vector<1x128xf32>
    %324 = arith.addf %322, %323 : vector<1x128xf32>
    %325 = math.tanh %324 : vector<1x128xf32>
    %326 = arith.mulf %321, %325 : vector<1x128xf32>
    %327 = tpu.concatenate %31, %71, %111, %151, %191, %231, %271, %311 in 0 : vector<1x128xf32>, vector<1x128xf32>, vector<1x128xf32>, vector<1x128xf32>, vector<1x128xf32>, vector<1x128xf32>, vector<1x128xf32>, vector<1x128xf32> -> vector<8x128xf32>
    %328 = tpu.concatenate %326, %286, %246, %206, %166, %126, %86, %46 in 0 : vector<1x128xf32>, vector<1x128xf32>, vector<1x128xf32>, vector<1x128xf32>, vector<1x128xf32>, vector<1x128xf32>, vector<1x128xf32>, vector<1x128xf32> -> vector<8x128xf32>
    %329 = tpu.concatenate %327, %328 in 1 : vector<8x128xf32>, vector<8x128xf32> -> vector<8x256xf32>
    %330 = arith.truncf %329 : vector<8x256xf32> to vector<8x256xbf16>
    %c0_115 = arith.constant 0 : index
    %c0_116 = arith.constant 0 : index
    %331 = vector.load %arg5[%c0_115, %c0_116] : memref<256x128xbf16, #tpu.memory_space<vmem>>, vector<256x128xbf16>
    %cst_117 = arith.constant dense<0.000000e+00> : vector<8x128xf32>
    %332 = tpu.matmul %330, %331, %cst_117 {dimension_numbers = #tpu.dot_dimension_numbers<[1], [0], [0], [1], [0, 0, 1, 1], [], []>} : vector<8x256xbf16>, vector<256x128xbf16>, vector<8x128xf32> -> vector<8x128xf32>
    %c0_118 = arith.constant 0 : index
    %c0_119 = arith.constant 0 : index
    %333 = vector.load %arg6[%c0_118, %c0_119] : memref<1x128xf32, #tpu.memory_space<vmem>>, vector<1x128xf32>
    %334 = vector.broadcast %333 : vector<1x128xf32> to vector<8x128xf32>
    %335 = arith.addf %332, %334 : vector<8x128xf32>
    %336 = math.tanh %335 : vector<8x128xf32>
    %c0_120 = arith.constant 0 : index
    %c0_121 = arith.constant 0 : index
    %337 = vector.load %arg7[%c0_120, %c0_121] : memref<1x128xf32, #tpu.memory_space<vmem>>, vector<1x128xf32>
    %338 = vector.broadcast %337 : vector<1x128xf32> to vector<8x128xf32>
    %339 = arith.mulf %336, %338 : vector<8x128xf32>
    %cst_122 = arith.constant dense<0.000000e+00> : vector<8xf32>
    %340 = vector.multi_reduction <add>, %339, %cst_122 [1] : vector<8x128xf32> to vector<8xf32>
    %341 = vector.shape_cast %340 : vector<8xf32> to vector<8x1xf32>
    %cst_123 = arith.constant dense<0xFF800000> : vector<1xf32>
    %342 = vector.multi_reduction <maximumf>, %341, %cst_123 [0] : vector<8x1xf32> to vector<1xf32>
    %343 = vector.shape_cast %342 : vector<1xf32> to vector<1x1xf32>
    %344 = vector.broadcast %343 : vector<1x1xf32> to vector<8x1xf32>
    %345 = arith.subf %341, %344 : vector<8x1xf32>
    %346 = math.exp %345 : vector<8x1xf32>
    %cst_124 = arith.constant dense<0.000000e+00> : vector<1xf32>
    %347 = vector.multi_reduction <add>, %346, %cst_124 [0] : vector<8x1xf32> to vector<1xf32>
    %348 = vector.shape_cast %347 : vector<1xf32> to vector<1x1xf32>
    %349 = tpu.reciprocal %348 {approx = true} : vector<1x1xf32> -> vector<1x1xf32>
    %350 = vector.broadcast %349 : vector<1x1xf32> to vector<8x1xf32>
    %351 = arith.mulf %346, %350 : vector<8x1xf32>
    %352 = vector.broadcast %351 : vector<8x1xf32> to vector<8x256xf32>
    %353 = arith.mulf %329, %352 : vector<8x256xf32>
    %cst_125 = arith.constant dense<0.000000e+00> : vector<256xf32>
    %354 = vector.multi_reduction <add>, %353, %cst_125 [0] : vector<8x256xf32> to vector<256xf32>
    %355 = vector.shape_cast %354 : vector<256xf32> to vector<1x256xf32>
    %356 = arith.truncf %355 : vector<1x256xf32> to vector<1x256xbf16>
    %c0_126 = arith.constant 0 : index
    %c0_127 = arith.constant 0 : index
    %357 = vector.load %arg9[%c0_126, %c0_127] : memref<256x128xbf16, #tpu.memory_space<vmem>>, vector<256x128xbf16>
    %cst_128 = arith.constant dense<0.000000e+00> : vector<1x128xf32>
    %358 = tpu.matmul %356, %357, %cst_128 {dimension_numbers = #tpu.dot_dimension_numbers<[1], [0], [0], [1], [0, 0, 1, 1], [], []>} : vector<1x256xbf16>, vector<256x128xbf16>, vector<1x128xf32> -> vector<1x128xf32>
    %c0_129 = arith.constant 0 : index
    %c0_130 = arith.constant 0 : index
    %359 = vector.load %arg10[%c0_129, %c0_130] : memref<1x128xf32, #tpu.memory_space<vmem>>, vector<1x128xf32>
    %360 = arith.addf %358, %359 : vector<1x128xf32>
    %c0_131 = arith.constant 0 : index
    %c0_132 = arith.constant 0 : index
    %361 = vector.load %arg0[%c0_131, %c0_132] : memref<2x128xbf16, #tpu.memory_space<vmem>>, vector<2x128xbf16>
    %c0_133 = arith.constant 0 : index
    %c0_134 = arith.constant 0 : index
    %362 = vector.load %arg8[%c0_133, %c0_134] : memref<128x128xbf16, #tpu.memory_space<vmem>>, vector<128x128xbf16>
    %cst_135 = arith.constant dense<0.000000e+00> : vector<2x128xf32>
    %363 = tpu.matmul %361, %362, %cst_135 {dimension_numbers = #tpu.dot_dimension_numbers<[1], [0], [0], [1], [0, 0, 1, 1], [], []>} : vector<2x128xbf16>, vector<128x128xbf16>, vector<2x128xf32> -> vector<2x128xf32>
    %364 = vector.broadcast %360 : vector<1x128xf32> to vector<2x128xf32>
    %365 = arith.addf %363, %364 : vector<2x128xf32>
    %c0_136 = arith.constant 0 : index
    %c0_137 = arith.constant 0 : index
    %366 = vector.load %arg11[%c0_136, %c0_137] : memref<2x128xf32, #tpu.memory_space<vmem>>, vector<2x128xf32>
    tpu.vector_store %arg11[%c0_136, %c0_137], %365 {strides = array<i32>} : memref<2x128xf32, #tpu.memory_space<vmem>>, vector<2x128xf32>,
    %367 = arith.negf %365 : vector<2x128xf32>
    %368 = math.exp %367 : vector<2x128xf32>
    %cst_138 = arith.constant 1.000000e+00 : f32
    %369 = vector.broadcast %cst_138 : f32 to vector<2x128xf32>
    %370 = arith.addf %369, %368 : vector<2x128xf32>
    %371 = arith.divf %369, %370 : vector<2x128xf32>
    %c0_139 = arith.constant 0 : index
    %c0_140 = arith.constant 0 : index
    %372 = vector.load %arg12[%c0_139, %c0_140] : memref<2x128xf32, #tpu.memory_space<vmem>>, vector<2x128xf32>
    tpu.vector_store %arg12[%c0_139, %c0_140], %371 {strides = array<i32>} : memref<2x128xf32, #tpu.memory_space<vmem>>, vector<2x128xf32>,
    return
  }
}

</mosaic_0001>

<llo_original>
// kernel: matchnet_forward.1
$region0: #{matchnet_forward.1}
  #allocation0 [shape = 'u32[]', space=smem, size = 0x4, offset = 0x4, fixed_abs, tag = 'smem constant byte address 0x4 - core index']
  #allocation1 [shape = 'u32[144,128]{1,0:T(1,128)}', space=vmem, size = 0x12000, scoped, tag = 'internal scratch']
  #allocation2 [shape = 'f32[8,256]{1,0:T(8,128)}', space=vmem, size = 0x2000, scoped, tag = 'scratch operand']
  %s0 = inlined_call_operand.vmem [shape: bf16[2,128], index: 0, kind: input, shape index: {}]
  %s1 = inlined_call_operand.vmem [shape: bf16[8,128], index: 1, kind: input, shape index: {}]
  %s2 = inlined_call_operand.hbm [shape: bf16[128,256], index: 2, kind: input, shape index: {}]
  %s3 = inlined_call_operand.vmem [shape: f32[1,256], index: 3, kind: input, shape index: {}]
  %s4 = inlined_call_operand.hbm [shape: bf16[256,256], index: 4, kind: input, shape index: {}]
  %s5 = inlined_call_operand.hbm [shape: bf16[256,128], index: 5, kind: input, shape index: {}]
  %s6 = inlined_call_operand.vmem [shape: f32[1,128], index: 6, kind: input, shape index: {}]
  %s7 = inlined_call_operand.vmem [shape: f32[1,128], index: 7, kind: input, shape index: {}]
  %s8 = inlined_call_operand.hbm [shape: bf16[128,128], index: 8, kind: input, shape index: {}]
  %s9 = inlined_call_operand.hbm [shape: bf16[256,128], index: 9, kind: input, shape index: {}]
  %s10 = inlined_call_operand.vmem [shape: f32[1,128], index: 10, kind: input, shape index: {}]
  %s11 = inlined_call_operand.hbm [shape: f32[2,128], index: 11, kind: output, shape index: {0}]
  %s12 = inlined_call_operand.hbm [shape: f32[2,128], index: 12, kind: output, shape index: {1}]
  %13 = xla_tuple %s11, %s12
  %s14 = sld [smem:[#allocation0]]
  $region82: #{matchnet_forward.1} parent=0
    _
  %s16 = ssub.s32 1, %s14
  %s17 = scalar_select 0, %s16, %s14
  $region1: #{matchnet_forward.1} parent=0
    #allocation3 [shape = 'u8[65536]{0}', space=vmem, size = 0x10000, scoped, tag = 'input window, operand 2, single buffered']
    #allocation4 [shape = 's32[1]{0}', space=sflag, size = 0x4, scoped, tag = 'scoped memory for matchnet_forward.1']
    #allocation5 [shape = 's32[1]{0}', space=sflag, size = 0x4, scoped, tag = 'scoped memory for matchnet_forward.1']
    #allocation6 [shape = 'u8[131072]{0}', space=vmem, size = 0x20000, scoped, tag = 'input window, operand 4, single buffered']
    #allocation7 [shape = 's32[1]{0}', space=sflag, size = 0x4, scoped, tag = 'scoped memory for matchnet_forward.1']
    #allocation8 [shape = 'u8[65536]{0}', space=vmem, size = 0x10000, scoped, tag = 'input window, operand 5, single buffered']
    #allocation9 [shape = 'u8[32768]{0}', space=vmem, size = 0x8000, scoped, tag = 'input window, operand 8, single buffered']
    #allocation10 [shape = 's32[1]{0}', space=sflag, size = 0x4, scoped, tag = 'scoped memory for matchnet_forward.1']
    #allocation11 [shape = 'u8[65536]{0}', space=vmem, size = 0x10000, scoped, tag = 'input window, operand 9, single buffered']
    #allocation12 [shape = 'u8[1024]{0}', space=vmem, size = 0x400, scoped, tag = 'output window, operand 0, single buffered']
    #allocation13 [shape = 'u8[1024]{0}', space=vmem, size = 0x400, scoped, tag = 'output window, operand 1, single buffered']
    #allocation14 [shape = 's32[1]{0}', space=sflag, size = 0x4, scoped, tag = 'scoped memory for matchnet_forward.1']
    %18 = vsyncpa [#allocation4], 0
    %19 = vsyncpa [#allocation7], 0
    %20 = vsyncpa [#allocation10], 0
    %21 = vsyncpa [#allocation5], 0
    %22 = vsyncpa [#allocation14], 0
    // Predicated region
    $region2: #{matchnet_forward.1} parent=1 // pred_check
      _
    $region3: #{matchnet_forward.1} parent=1 // pred_check_branch
      %24 = sbr.rel (0) target = $region5
    $region4: #{matchnet_forward.1} parent=1 // pred_region
      _
    $region5: #{matchnet_forward.1} parent=1 // pred_fallthru
      _
    // Predicated region
    $region6: #{matchnet_forward.1} parent=1 // pred_check
      _
    $region7: #{matchnet_forward.1} parent=1 // pred_check_branch
      %26 = sbr.rel (0) target = $region9
    $region8: #{matchnet_forward.1} parent=1 // pred_region
      _
    $region9: #{matchnet_forward.1} parent=1 // pred_fallthru
      _
    // Predicated region
    $region10: #{matchnet_forward.1} parent=1 // pred_check
      _
    $region11: #{matchnet_forward.1} parent=1 // pred_check_branch
      %28 = sbr.rel (0) target = $region13
    $region12: #{matchnet_forward.1} parent=1 // pred_region
      %s30 = ssub.s32 2048, 2048
      %31 = vsyncadd [#allocation4], %s30
      %s32 = sshll.u32 [#allocation3], 4
      %s33 = int_to_ptr.vmem [resolvable:$true] %s32
      %38 = dma.hbm_to_vmem [thread:$0]  %s2, 2048, %s33, [#allocation4], 128, 128, 8
    $region13: #{matchnet_forward.1} parent=1 // pred_fallthru
      _
    // Predicated region
    $region14: #{matchnet_forward.1} parent=1 // pred_check
      _
    $region15: #{matchnet_forward.1} parent=1 // pred_check_branch
      %40 = sbr.rel (0) target = $region17
    $region16: #{matchnet_forward.1} parent=1 // pred_region
      _
    $region17: #{matchnet_forward.1} parent=1 // pred_fallthru
      _
    // Predicated region
    $region18: #{matchnet_forward.1} parent=1 // pred_check
      _
    $region19: #{matchnet_forward.1} parent=1 // pred_check_branch
      %42 = sbr.rel (0) target = $region21
    $region20: #{matchnet_forward.1} parent=1 // pred_region
      %s44 = ssub.s32 4096, 4096
      %45 = vsyncadd [#allocation7], %s44
      %s46 = sshll.u32 [#allocation6], 4
      %s47 = int_to_ptr.vmem [resolvable:$true] %s46
      %52 = dma.hbm_to_vmem [thread:$0]  %s4, 4096, %s47, [#allocation7], 128, 128, 8
    $region21: #{matchnet_forward.1} parent=1 // pred_fallthru
      _
    // Predicated region
    $region22: #{matchnet_forward.1} parent=1 // pred_check
      _
    $region23: #{matchnet_forward.1} parent=1 // pred_check_branch
      %54 = sbr.rel (0) target = $region25
    $region24: #{matchnet_forward.1} parent=1 // pred_region
      %s56 = ssub.s32 2048, 2048
      %57 = vsyncadd [#allocation7], %s56
      %s58 = sshll.u32 [#allocation8], 4
      %s59 = int_to_ptr.vmem [resolvable:$true] %s58
      %64 = dma.hbm_to_vmem [thread:$0]  %s5, 2048, %s59, [#allocation7], 64, 64, 4
    $region25: #{matchnet_forward.1} parent=1 // pred_fallthru
      _
    // Predicated region
    $region26: #{matchnet_forward.1} parent=1 // pred_check
      _
    $region27: #{matchnet_forward.1} parent=1 // pred_check_branch
      %66 = sbr.rel (0) target = $region29
    $region28: #{matchnet_forward.1} parent=1 // pred_region
      _
    $region29: #{matchnet_forward.1} parent=1 // pred_fallthru
      _
    // Predicated region
    $region30: #{matchnet_forward.1} parent=1 // pred_check
      _
    $region31: #{matchnet_forward.1} parent=1 // pred_check_branch
      %68 = sbr.rel (0) target = $region33
    $region32: #{matchnet_forward.1} parent=1 // pred_region
      _
    $region33: #{matchnet_forward.1} parent=1 // pred_fallthru
      _
    // Predicated region
    $region34: #{matchnet_forward.1} parent=1 // pred_check
      _
    $region35: #{matchnet_forward.1} parent=1 // pred_check_branch
      %70 = sbr.rel (0) target = $region37
    $region36: #{matchnet_forward.1} parent=1 // pred_region
      %s72 = ssub.s32 1024, 1024
      %73 = vsyncadd [#allocation10], %s72
      %s74 = sshll.u32 [#allocation9], 4
      %s75 = int_to_ptr.vmem [resolvable:$true] %s74
      %80 = dma.hbm_to_vmem [thread:$0]  %s8, 1024, %s75, [#allocation10], 64, 64, 4
    $region37: #{matchnet_forward.1} parent=1 // pred_fallthru
      _
    // Predicated region
    $region38: #{matchnet_forward.1} parent=1 // pred_check
      _
    $region39: #{matchnet_forward.1} parent=1 // pred_check_branch
      %82 = sbr.rel (0) target = $region41
    $region40: #{matchnet_forward.1} parent=1 // pred_region
      %s84 = ssub.s32 2048, 2048
      %85 = vsyncadd [#allocation10], %s84
      %s86 = sshll.u32 [#allocation11], 4
      %s87 = int_to_ptr.vmem [resolvable:$true] %s86
      %92 = dma.hbm_to_vmem [thread:$0]  %s9, 2048, %s87, [#allocation10], 64, 64, 4
    $region41: #{matchnet_forward.1} parent=1 // pred_fallthru
      _
    // Predicated region
    $region42: #{matchnet_forward.1} parent=1 // pred_check
      _
    $region43: #{matchnet_forward.1} parent=1 // pred_check_branch
      %94 = sbr.rel (0) target = $region45
    $region44: #{matchnet_forward.1} parent=1 // pred_region
      _
    $region45: #{matchnet_forward.1} parent=1 // pred_fallthru
      _
    // Predicated region
    $region46: #{matchnet_forward.1} parent=1 // pred_check
      _
    $region47: #{matchnet_forward.1} parent=1 // pred_check_branch
      %96 = sbr.rel (0) target = $region49
    $region48: #{matchnet_forward.1} parent=1 // pred_region
      %97 = dma.done [#allocation4], 2048
    $region49: #{matchnet_forward.1} parent=1 // pred_fallthru
      _
    // Predicated region
    $region50: #{matchnet_forward.1} parent=1 // pred_check
      _
    $region51: #{matchnet_forward.1} parent=1 // pred_check_branch
      %99 = sbr.rel (0) target = $region53
    $region52: #{matchnet_forward.1} parent=1 // pred_region
      %100 = dma.done [#allocation7], 4096
    $region53: #{matchnet_forward.1} parent=1 // pred_fallthru
      _
    // Predicated region
    $region54: #{matchnet_forward.1} parent=1 // pred_check
      _
    $region55: #{matchnet_forward.1} parent=1 // pred_check_branch
      %102 = sbr.rel (0) target = $region57
    $region56: #{matchnet_forward.1} parent=1 // pred_region
      %103 = dma.done [#allocation7], 2048
    $region57: #{matchnet_forward.1} parent=1 // pred_fallthru
      _
    // Predicated region
    $region58: #{matchnet_forward.1} parent=1 // pred_check
      _
    $region59: #{matchnet_forward.1} parent=1 // pred_check_branch
      %105 = sbr.rel (0) target = $region61
    $region60: #{matchnet_forward.1} parent=1 // pred_region
      %106 = dma.done [#allocation10], 1024
    $region61: #{matchnet_forward.1} parent=1 // pred_fallthru
      _
    // Predicated region
    $region62: #{matchnet_forward.1} parent=1 // pred_check
      _
    $region63: #{matchnet_forward.1} parent=1 // pred_check_branch
      %108 = sbr.rel (0) target = $region65
    $region64: #{matchnet_forward.1} parent=1 // pred_region
      %109 = dma.done [#allocation10], 2048
    $region65: #{matchnet_forward.1} parent=1 // pred_fallthru
      _
    %v111 = vld [vmem:[%s1] sm:$0xf]
    %v112 = vld [vmem:[#allocation3] sm:$0xff]
    %v113 = vld [vmem:[#allocation3 + $0x8] sm:$0xff]
    %v114 = vld [vmem:[#allocation3 + $0x10] sm:$0xff]
    %v115 = vld [vmem:[#allocation3 + $0x18] sm:$0xff]
    %v116 = vld [vmem:[#allocation3 + $0x20] sm:$0xff]
    %v117 = vld [vmem:[#allocation3 + $0x28] sm:$0xff]
    %v118 = vld [vmem:[#allocation3 + $0x30] sm:$0xff]
    %v119 = vld [vmem:[#allocation3 + $0x38] sm:$0xff]
    %v120 = vld [vmem:[#allocation3 + $0x40] sm:$0xff]
    %v121 = vld [vmem:[#allocation3 + $0x48] sm:$0xff]
    %v122 = vld [vmem:[#allocation3 + $0x50] sm:$0xff]
    %v123 = vld [vmem:[#allocation3 + $0x58] sm:$0xff]
    %v124 = vld [vmem:[#allocation3 + $0x60] sm:$0xff]
    %v125 = vld [vmem:[#allocation3 + $0x68] sm:$0xff]
    %v126 = vld [vmem:[#allocation3 + $0x70] sm:$0xff]
    %v127 = vld [vmem:[#allocation3 + $0x78] sm:$0xff]
    %v128 = vld [vmem:[%s3] sm:$0x3]
    %v130 = vlaneseq
    %v131 = vshrl.u32 %v130, 7
    %v132 = vsub.s32 0, %v131
    %v133 = vrot.slane %v128, %v132
    %v134 = vlaneseq
    %v135 = vshrl.u32 %v134, 7
    %v136 = vsub.s32 1, %v135
    %v137 = vrot.slane %v128, %v136
    %v156 = vunpack.c.l.b16 %v112
    %v157 = vunpack.c.h.b16 %v112
    %v158 = vunpack.c.l.b16 %v113
    %v159 = vunpack.c.h.b16 %v113
    %v160 = vunpack.c.l.b16 %v114
    %v161 = vunpack.c.h.b16 %v114
    %v162 = vunpack.c.l.b16 %v115
    %v163 = vunpack.c.h.b16 %v115
    %v164 = vunpack.c.l.b16 %v116
    %v165 = vunpack.c.h.b16 %v116
    %v166 = vunpack.c.l.b16 %v117
    %v167 = vunpack.c.h.b16 %v117
    %v168 = vunpack.c.l.b16 %v118
    %v169 = vunpack.c.h.b16 %v118
    %v170 = vunpack.c.l.b16 %v119
    %v171 = vunpack.c.h.b16 %v119
    %v172 = vunpack.c.l.b16 %v120
    %v173 = vunpack.c.h.b16 %v120
    %v174 = vunpack.c.l.b16 %v121
    %v175 = vunpack.c.h.b16 %v121
    %v176 = vunpack.c.l.b16 %v122
    %v177 = vunpack.c.h.b16 %v122
    %v178 = vunpack.c.l.b16 %v123
    %v179 = vunpack.c.h.b16 %v123
    %v180 = vunpack.c.l.b16 %v124
    %v181 = vunpack.c.h.b16 %v124
    %v182 = vunpack.c.l.b16 %v125
    %v183 = vunpack.c.h.b16 %v125
    %v184 = vunpack.c.l.b16 %v126
    %v185 = vunpack.c.h.b16 %v126
    %v186 = vunpack.c.l.b16 %v127
    %v187 = vunpack.c.h.b16 %v127
    %v188 = vpack.c.b16 %v158, %v156
    %v189 = vpack.c.b16 %v159, %v157
    %v190 = vpack.c.b16 %v162, %v160
    %v191 = vpack.c.b16 %v163, %v161
    %v192 = vpack.c.b16 %v166, %v164
    %v193 = vpack.c.b16 %v167, %v165
    %v194 = vpack.c.b16 %v170, %v168
    %v195 = vpack.c.b16 %v171, %v169
    %v196 = vpack.c.b16 %v174, %v172
    %v197 = vpack.c.b16 %v175, %v173
    %v198 = vpack.c.b16 %v178, %v176
    %v199 = vpack.c.b16 %v179, %v177
    %v200 = vpack.c.b16 %v182, %v180
    %v201 = vpack.c.b16 %v183, %v181
    %v202 = vpack.c.b16 %v186, %v184
    %v203 = vpack.c.b16 %v187, %v185
    %220 = vmatprep.subr.bf16.mxu0 %v203
    %221 = vmatpush1.bf16.msra.mxu0 %v202
    %222 = vmatprep.subr.bf16.mxu0 %v201
    %223 = vmatpush1.bf16.msra.mxu0 %v200
    %224 = vmatprep.subr.bf16.mxu0 %v199
    %225 = vmatpush1.bf16.msra.mxu0 %v198
    %226 = vmatprep.subr.bf16.mxu0 %v197
    %227 = vmatpush1.bf16.msra.mxu0 %v196
    %228 = vmatprep.subr.bf16.mxu0 %v195
    %229 = vmatpush1.bf16.msra.mxu0 %v194
    %230 = vmatprep.subr.bf16.mxu0 %v193
    %231 = vmatpush1.bf16.msra.mxu0 %v192
    %232 = vmatprep.subr.bf16.mxu0 %v191
    %233 = vmatpush1.bf16.msra.mxu0 %v190
    %234 = vmatprep.subr.bf16.mxu0 %v189
    %235 = vmatpush1.bf16.msra.mxu0 %v188
    %236 = vmatprep.subr.bf16.mxu0 0
    %237 = vmatpush2.bf16.msra.mxu0 0
    %238 = vmatprep.subr.bf16.mxu0 0
    %239 = vmatpush2.bf16.msra.mxu0 0
    %240 = vmatprep.subr.bf16.mxu0 0
    %241 = vmatpush2.bf16.msra.mxu0 0
    %242 = vmatprep.subr.bf16.mxu0 0
    %243 = vmatpush2.bf16.msra.mxu0 0
    %244 = vmatprep.subr.bf16.mxu0 0
    %245 = vmatpush2.bf16.msra.mxu0 0
    %246 = vmatprep.subr.bf16.mxu0 0
    %247 = vmatpush2.bf16.msra.mxu0 0
    %248 = vmatprep.subr.bf16.mxu0 0
    %249 = vmatpush2.bf16.msra.mxu0 0
    %250 = vmatprep.subr.bf16.mxu0 0
    %251 = vmatpush2.bf16.msra.mxu0 0
    %252 = vmatprep.mubr.bf16.mxu0 0
    %253 = vmatmul.mubr.bf16.gmra.mxu0 %v111
    %v254 = vpop.f32.mrf.mxu0
    %v255 = vadd.f32 %v133, %v254
    %v256 = vpop.f32.mrf.mxu0
    %v257 = vadd.f32 %v137, %v256
    %v258 = vpop.f32.mrf.mxu0
    %v259 = vpop.f32.mrf.mxu0
    %260 = vdwg.mxu0
    %261 = vst [vmem:[#allocation2] sm:$0xff] %v255
    %262 = vst [vmem:[#allocation2 + $0x8] sm:$0xff] %v257
    %v263 = vlaneseq
    %v264 = vand.u32 %v263, 127
    %vm265 = vcmp.ge.s32.totalorder %v264, 32
    %vm266 = vcmp.lt.s32.totalorder %v264, 48
    %vm267 = vmand %vm265, %vm266
    %v268 = vld [vmem:[#allocation2] ss:$0 sm:$0xff]
    %v269 = vld [vmem:[#allocation2 + $0xf] ss:$0 sm:$0xff]
    %v270 = vtanh.pop %v268
    %v271 = vxor.u32 %v268, 2147483648
    %v272 = vmul.f32 %v271, 1.442695
    %v273 = vpow.pop %v272
    %v274 = vadd.f32 %v273, 1.0
    %v275 = vrcp.pop %v274
    %v276 = vmul.f32 1.0, %v275
    %v277 = vsel %vm267, %v270, %v276
    %278 = vrot.lane.b32.xlu0 %v277, 112
    %v279 = vpop.permute.xlu0 %278
    %280 = vrot.lane.b32.xlu0 %v277, 96
    %v281 = vpop.permute.xlu0 %280
    %282 = vrot.lane.b32.xlu0 %v277, 80
    %v283 = vpop.permute.xlu0 %282
    %v284 = vmul.f32 %v279, 0.0
    %v285 = vmul.f32 %v277, %v281
    %v286 = vadd.f32 %v284, %v285
    %v287 = vtanh.pop %v286
    %v288 = vmul.f32 %v283, %v287
    %v289 = vtanh.pop %v269
    %v290 = vxor.u32 %v269, 2147483648
    %v291 = vmul.f32 %v290, 1.442695
    %v292 = vpow.pop %v291
    %v293 = vadd.f32 %v292, 1.0
    %v294 = vrcp.pop %v293
    %v295 = vmul.f32 1.0, %v294
    %v296 = vsel %vm267, %v289, %v295
    %297 = vrot.lane.b32.xlu0 %v296, 112
    %v298 = vpop.permute.xlu0 %297
    %299 = vrot.lane.b32.xlu0 %v296, 96
    %v300 = vpop.permute.xlu0 %299
    %301 = vrot.lane.b32.xlu0 %v296, 80
    %v302 = vpop.permute.xlu0 %301
    %v303 = vmul.f32 %v298, 0.0
    %v304 = vmul.f32 %v296, %v300
    %v305 = vadd.f32 %v303, %v304
    %v306 = vtanh.pop %v305
    %v307 = vmul.f32 %v302, %v306
    %v308 = vpack.c.bf16 %v288, %v288
    %v309 = vpack.c.bf16 %v307, %v307
    %v310 = vld [vmem:[#allocation6] sm:$0xff]
    %v311 = vld [vmem:[#allocation6 + $0x8] sm:$0xff]
    %v312 = vld [vmem:[#allocation6 + $0x10] sm:$0xff]
    %v313 = vld [vmem:[#allocation6 + $0x18] sm:$0xff]
    %v314 = vld [vmem:[#allocation6 + $0x20] sm:$0xff]
    %v315 = vld [vmem:[#allocation6 + $0x28] sm:$0xff]
    %v316 = vld [vmem:[#allocation6 + $0x30] sm:$0xff]
    %v317 = vld [vmem:[#allocation6 + $0x38] sm:$0xff]
    %v318 = vld [vmem:[#allocation6 + $0x40] sm:$0xff]
    %v319 = vld [vmem:[#allocation6 + $0x48] sm:$0xff]
    %v320 = vld [vmem:[#allocation6 + $0x50] sm:$0xff]
    %v321 = vld [vmem:[#allocation6 + $0x58] sm:$0xff]
    %v322 = vld [vmem:[#allocation6 + $0x60] sm:$0xff]
    %v323 = vld [vmem:[#allocation6 + $0x68] sm:$0xff]
    %v324 = vld [vmem:[#allocation6 + $0x70] sm:$0xff]
    %v325 = vld [vmem:[#allocation6 + $0x78] sm:$0xff]
    %v326 = vld [vmem:[#allocation6 + $0x80] sm:$0xff]
    %v327 = vld [vmem:[#allocation6 + $0x88] sm:$0xff]
    %v328 = vld [vmem:[#allocation6 + $0x90] sm:$0xff]
    %v329 = vld [vmem:[#allocation6 + $0x98] sm:$0xff]
    %v330 = vld [vmem:[#allocation6 + $0xa0] sm:$0xff]
    %v331 = vld [vmem:[#allocation6 + $0xa8] sm:$0xff]
    %v332 = vld [vmem:[#allocation6 + $0xb0] sm:$0xff]
    %v333 = vld [vmem:[#allocation6 + $0xb8] sm:$0xff]
    %v334 = vld [vmem:[#allocation6 + $0xc0] sm:$0xff]
    %v335 = vld [vmem:[#allocation6 + $0xc8] sm:$0xff]
    %v336 = vld [vmem:[#allocation6 + $0xd0] sm:$0xff]
    %v337 = vld [vmem:[#allocation6 + $0xd8] sm:$0xff]
    %v338 = vld [vmem:[#allocation6 + $0xe0] sm:$0xff]
    %v339 = vld [vmem:[#allocation6 + $0xe8] sm:$0xff]
    %v340 = vld [vmem:[#allocation6 + $0xf0] sm:$0xff]
    %v341 = vld [vmem:[#allocation6 + $0xf8] sm:$0xff]
    %v374 = vunpack.c.l.b16 %v310
    %v375 = vunpack.c.h.b16 %v310
    %v376 = vunpack.c.l.b16 %v311
    %v377 = vunpack.c.h.b16 %v311
    %v378 = vunpack.c.l.b16 %v312
    %v379 = vunpack.c.h.b16 %v312
    %v380 = vunpack.c.l.b16 %v313
    %v381 = vunpack.c.h.b16 %v313
    %v382 = vunpack.c.l.b16 %v314
    %v383 = vunpack.c.h.b16 %v314
    %v384 = vunpack.c.l.b16 %v315
    %v385 = vunpack.c.h.b16 %v315
    %v386 = vunpack.c.l.b16 %v316
    %v387 = vunpack.c.h.b16 %v316
    %v388 = vunpack.c.l.b16 %v317
    %v389 = vunpack.c.h.b16 %v317
    %v390 = vunpack.c.l.b16 %v318
    %v391 = vunpack.c.h.b16 %v318
    %v392 = vunpack.c.l.b16 %v319
    %v393 = vunpack.c.h.b16 %v319
    %v394 = vunpack.c.l.b16 %v320
    %v395 = vunpack.c.h.b16 %v320
    %v396 = vunpack.c.l.b16 %v321
    %v397 = vunpack.c.h.b16 %v321
    %v398 = vunpack.c.l.b16 %v322
    %v399 = vunpack.c.h.b16 %v322
    %v400 = vunpack.c.l.b16 %v323
    %v401 = vunpack.c.h.b16 %v323
    %v402 = vunpack.c.l.b16 %v324
    %v403 = vunpack.c.h.b16 %v324
    %v404 = vunpack.c.l.b16 %v325
    %v405 = vunpack.c.h.b16 %v325
    %v406 = vunpack.c.l.b16 %v326
    %v407 = vunpack.c.h.b16 %v326
    %v408 = vunpack.c.l.b16 %v327
    %v409 = vunpack.c.h.b16 %v327
    %v410 = vunpack.c.l.b16 %v328
    %v411 = vunpack.c.h.b16 %v328
    %v412 = vunpack.c.l.b16 %v329
    %v413 = vunpack.c.h.b16 %v329
    %v414 = vunpack.c.l.b16 %v330
    %v415 = vunpack.c.h.b16 %v330
    %v416 = vunpack.c.l.b16 %v331
    %v417 = vunpack.c.h.b16 %v331
    %v418 = vunpack.c.l.b16 %v332
    %v419 = vunpack.c.h.b16 %v332
    %v420 = vunpack.c.l.b16 %v333
    %v421 = vunpack.c.h.b16 %v333
    %v422 = vunpack.c.l.b16 %v334
    %v423 = vunpack.c.h.b16 %v334
    %v424 = vunpack.c.l.b16 %v335
    %v425 = vunpack.c.h.b16 %v335
    %v426 = vunpack.c.l.b16 %v336
    %v427 = vunpack.c.h.b16 %v336
    %v428 = vunpack.c.l.b16 %v337
    %v429 = vunpack.c.h.b16 %v337
    %v430 = vunpack.c.l.b16 %v338
    %v431 = vunpack.c.h.b16 %v338
    %v432 = vunpack.c.l.b16 %v339
    %v433 = vunpack.c.h.b16 %v339
    %v434 = vunpack.c.l.b16 %v340
    %v435 = vunpack.c.h.b16 %v340
    %v436 = vunpack.c.l.b16 %v341
    %v437 = vunpack.c.h.b16 %v341
    %v438 = vpack.c.b16 %v376, %v374
    %v439 = vpack.c.b16 %v377, %v375
    %v440 = vpack.c.b16 %v380, %v378
    %v441 = vpack.c.b16 %v381, %v379
    %v442 = vpack.c.b16 %v384, %v382
    %v443 = vpack.c.b16 %v385, %v383
    %v444 = vpack.c.b16 %v388, %v386
    %v445 = vpack.c.b16 %v389, %v387
    %v446 = vpack.c.b16 %v392, %v390
    %v447 = vpack.c.b16 %v393, %v391
    %v448 = vpack.c.b16 %v396, %v394
    %v449 = vpack.c.b16 %v397, %v395
    %v450 = vpack.c.b16 %v400, %v398
    %v451 = vpack.c.b16 %v401, %v399
    %v452 = vpack.c.b16 %v404, %v402
    %v453 = vpack.c.b16 %v405, %v403
    %v454 = vpack.c.b16 %v408, %v406
    %v455 = vpack.c.b16 %v409, %v407
    %v456 = vpack.c.b16 %v412, %v410
    %v457 = vpack.c.b16 %v413, %v411
    %v458 = vpack.c.b16 %v416, %v414
    %v459 = vpack.c.b16 %v417, %v415
    %v460 = vpack.c.b16 %v420, %v418
    %v461 = vpack.c.b16 %v421, %v419
    %v462 = vpack.c.b16 %v424, %v422
    %v463 = vpack.c.b16 %v425, %v423
    %v464 = vpack.c.b16 %v428, %v426
    %v465 = vpack.c.b16 %v429, %v427
    %v466 = vpack.c.b16 %v432, %v430
    %v467 = vpack.c.b16 %v433, %v431
    %v468 = vpack.c.b16 %v436, %v434
    %v469 = vpack.c.b16 %v437, %v435
    %502 = vmatprep.subr.bf16.mxu0 %v453
    %503 = vmatpush1.bf16.msra.mxu0 %v452
    %504 = vmatprep.subr.bf16.mxu0 %v451
    %505 = vmatpush1.bf16.msra.mxu0 %v450
    %506 = vmatprep.subr.bf16.mxu0 %v449
    %507 = vmatpush1.bf16.msra.mxu0 %v448
    %508 = vmatprep.subr.bf16.mxu0 %v447
    %509 = vmatpush1.bf16.msra.mxu0 %v446
    %510 = vmatprep.subr.bf16.mxu0 %v445
    %511 = vmatpush1.bf16.msra.mxu0 %v444
    %512 = vmatprep.subr.bf16.mxu0 %v443
    %513 = vmatpush1.bf16.msra.mxu0 %v442
    %514 = vmatprep.subr.bf16.mxu0 %v441
    %515 = vmatpush1.bf16.msra.mxu0 %v440
    %516 = vmatprep.subr.bf16.mxu0 %v439
    %517 = vmatpush1.bf16.msra.mxu0 %v438
    %518 = vmatprep.subr.bf16.mxu0 %v469
    %519 = vmatpush2.bf16.msra.mxu0 %v468
    %520 = vmatprep.subr.bf16.mxu0 %v467
    %521 = vmatpush2.bf16.msra.mxu0 %v466
    %522 = vmatprep.subr.bf16.mxu0 %v465
    %523 = vmatpush2.bf16.msra.mxu0 %v464
    %524 = vmatprep.subr.bf16.mxu0 %v463
    %525 = vmatpush2.bf16.msra.mxu0 %v462
    %526 = vmatprep.subr.bf16.mxu0 %v461
    %527 = vmatpush2.bf16.msra.mxu0 %v460
    %528 = vmatprep.subr.bf16.mxu0 %v459
    %529 = vmatpush2.bf16.msra.mxu0 %v458
    %530 = vmatprep.subr.bf16.mxu0 %v457
    %531 = vmatpush2.bf16.msra.mxu0 %v456
    %532 = vmatprep.subr.bf16.mxu0 %v455
    %533 = vmatpush2.bf16.msra.mxu0 %v454
    %534 = vmatprep.mubr.bf16.mxu0 %v309
    %535 = vmatmul.mubr.bf16.gmra.mxu0 %v308
    %v536 = vpop.f32.mrf.mxu0
    %v537 = vadd.f32 0.0, %v536
    %v538 = vpop.f32.mrf.mxu0
    %v539 = vadd.f32 0.0, %v538
    %v540 = vpop.f32.mrf.mxu0
    %v541 = vpop.f32.mrf.mxu0
    %542 = vdwg.mxu0
    %v543 = vld [vmem:[#allocation2 + $0x1] ss:$0 sm:$0xff]
    %v544 = vadd.f32 %v543, %v537
    %v545 = vld [vmem:[#allocation2 + $0xe] ss:$0 sm:$0xff]
    %v546 = vadd.f32 %v545, %v539
    %v547 = vtanh.pop %v544
    %v548 = vxor.u32 %v544, 2147483648
    %v549 = vmul.f32 %v548, 1.442695
    %v550 = vpow.pop %v549
    %v551 = vadd.f32 %v550, 1.0
    %v552 = vrcp.pop %v551
    %v553 = vmul.f32 1.0, %v552
    %v554 = vsel %vm267, %v547, %v553
    %555 = vrot.lane.b32.xlu0 %v554, 112
    %v556 = vpop.permute.xlu0 %555
    %557 = vrot.lane.b32.xlu0 %v554, 96
    %v558 = vpop.permute.xlu0 %557
    %559 = vrot.lane.b32.xlu0 %v554, 80
    %v560 = vpop.permute.xlu0 %559
    %v561 = vmul.f32 %v556, %v286
    %v562 = vmul.f32 %v554, %v558
    %v563 = vadd.f32 %v561, %v562
    %v564 = vtanh.pop %v563
    %v565 = vmul.f32 %v560, %v564
    %v566 = vtanh.pop %v546
    %v567 = vxor.u32 %v546, 2147483648
    %v568 = vmul.f32 %v567, 1.442695
    %v569 = vpow.pop %v568
    %v570 = vadd.f32 %v569, 1.0
    %v571 = vrcp.pop %v570
    %v572 = vmul.f32 1.0, %v571
    %v573 = vsel %vm267, %v566, %v572
    %574 = vrot.lane.b32.xlu0 %v573, 112
    %v575 = vpop.permute.xlu0 %574
    %576 = vrot.lane.b32.xlu0 %v573, 96
    %v577 = vpop.permute.xlu0 %576
    %578 = vrot.lane.b32.xlu0 %v573, 80
    %v579 = vpop.permute.xlu0 %578
    %v580 = vmul.f32 %v575, %v305
    %v581 = vmul.f32 %v573, %v577
    %v582 = vadd.f32 %v580, %v581
    %v583 = vtanh.pop %v582
    %v584 = vmul.f32 %v579, %v583
    %v585 = vpack.c.bf16 %v565, %v565
    %v586 = vpack.c.bf16 %v584, %v584
    %587 = vmatprep.subr.bf16.mxu0 %v453
    %588 = vmatpush1.bf16.msra.mxu0 %v452
    %589 = vmatprep.subr.bf16.mxu0 %v451
    %590 = vmatpush1.bf16.msra.mxu0 %v450
    %591 = vmatprep.subr.bf16.mxu0 %v449
    %592 = vmatpush1.bf16.msra.mxu0 %v448
    %593 = vmatprep.subr.bf16.mxu0 %v447
    %594 = vmatpush1.bf16.msra.mxu0 %v446
    %595 = vmatprep.subr.bf16.mxu0 %v445
    %596 = vmatpush1.bf16.msra.mxu0 %v444
    %597 = vmatprep.subr.bf16.mxu0 %v443
    %598 = vmatpush1.bf16.msra.mxu0 %v442
    %599 = vmatprep.subr.bf16.mxu0 %v441
    %600 = vmatpush1.bf16.msra.mxu0 %v440
    %601 = vmatprep.subr.bf16.mxu0 %v439
    %602 = vmatpush1.bf16.msra.mxu0 %v438
    %603 = vmatprep.subr.bf16.mxu0 %v469
    %604 = vmatpush2.bf16.msra.mxu0 %v468
    %605 = vmatprep.subr.bf16.mxu0 %v467
    %606 = vmatpush2.bf16.msra.mxu0 %v466
    %607 = vmatprep.subr.bf16.mxu0 %v465
    %608 = vmatpush2.bf16.msra.mxu0 %v464
    %609 = vmatprep.subr.bf16.mxu0 %v463
    %610 = vmatpush2.bf16.msra.mxu0 %v462
    %611 = vmatprep.subr.bf16.mxu0 %v461
    %612 = vmatpush2.bf16.msra.mxu0 %v460
    %613 = vmatprep.subr.bf16.mxu0 %v459
    %614 = vmatpush2.bf16.msra.mxu0 %v458
    %615 = vmatprep.subr.bf16.mxu0 %v457
    %616 = vmatpush2.bf16.msra.mxu0 %v456
    %617 = vmatprep.subr.bf16.mxu0 %v455
    %618 = vmatpush2.bf16.msra.mxu0 %v454
    %619 = vmatprep.mubr.bf16.mxu0 %v586
    %620 = vmatmul.mubr.bf16.gmra.mxu0 %v585
    %v621 = vpop.f32.mrf.mxu0
    %v622 = vadd.f32 0.0, %v621
    %v623 = vpop.f32.mrf.mxu0
    %v624 = vadd.f32 0.0, %v623
    %v625 = vpop.f32.mrf.mxu0
    %v626 = vpop.f32.mrf.mxu0
    %627 = vdwg.mxu0
    %v628 = vld [vmem:[#allocation2 + $0x2] ss:$0 sm:$0xff]
    %v629 = vadd.f32 %v628, %v622
    %v630 = vld [vmem:[#allocation2 + $0xd] ss:$0 sm:$0xff]
    %v631 = vadd.f32 %v630, %v624
    %v632 = vtanh.pop %v629
    %v633 = vxor.u32 %v629, 2147483648
    %v634 = vmul.f32 %v633, 1.442695
    %v635 = vpow.pop %v634
    %v636 = vadd.f32 %v635, 1.0
    %v637 = vrcp.pop %v636
    %v638 = vmul.f32 1.0, %v637
    %v639 = vsel %vm267, %v632, %v638
    %640 = vrot.lane.b32.xlu0 %v639, 112
    %v641 = vpop.permute.xlu0 %640
    %642 = vrot.lane.b32.xlu0 %v639, 96
    %v643 = vpop.permute.xlu0 %642
    %644 = vrot.lane.b32.xlu0 %v639, 80
    %v645 = vpop.permute.xlu0 %644
    %v646 = vmul.f32 %v641, %v563
    %v647 = vmul.f32 %v639, %v643
    %v648 = vadd.f32 %v646, %v647
    %v649 = vtanh.pop %v648
    %v650 = vmul.f32 %v645, %v649
    %v651 = vtanh.pop %v631
    %v652 = vxor.u32 %v631, 2147483648
    %v653 = vmul.f32 %v652, 1.442695
    %v654 = vpow.pop %v653
    %v655 = vadd.f32 %v654, 1.0
    %v656 = vrcp.pop %v655
    %v657 = vmul.f32 1.0, %v656
    %v658 = vsel %vm267, %v651, %v657
    %659 = vrot.lane.b32.xlu0 %v658, 112
    %v660 = vpop.permute.xlu0 %659
    %661 = vrot.lane.b32.xlu0 %v658, 96
    %v662 = vpop.permute.xlu0 %661
    %663 = vrot.lane.b32.xlu0 %v658, 80
    %v664 = vpop.permute.xlu0 %663
    %v665 = vmul.f32 %v660, %v582
    %v666 = vmul.f32 %v658, %v662
    %v667 = vadd.f32 %v665, %v666
    %v668 = vtanh.pop %v667
    %v669 = vmul.f32 %v664, %v668
    %v670 = vpack.c.bf16 %v650, %v650
    %v671 = vpack.c.bf16 %v669, %v669
    %672 = vmatprep.subr.bf16.mxu0 %v453
    %673 = vmatpush1.bf16.msra.mxu0 %v452
    %674 = vmatprep.subr.bf16.mxu0 %v451
    %675 = vmatpush1.bf16.msra.mxu0 %v450
    %676 = vmatprep.subr.bf16.mxu0 %v449
    %677 = vmatpush1.bf16.msra.mxu0 %v448
    %678 = vmatprep.subr.bf16.mxu0 %v447
    %679 = vmatpush1.bf16.msra.mxu0 %v446
    %680 = vmatprep.subr.bf16.mxu0 %v445
    %681 = vmatpush1.bf16.msra.mxu0 %v444
    %682 = vmatprep.subr.bf16.mxu0 %v443
    %683 = vmatpush1.bf16.msra.mxu0 %v442
    %684 = vmatprep.subr.bf16.mxu0 %v441
    %685 = vmatpush1.bf16.msra.mxu0 %v440
    %686 = vmatprep.subr.bf16.mxu0 %v439
    %687 = vmatpush1.bf16.msra.mxu0 %v438
    %688 = vmatprep.subr.bf16.mxu0 %v469
    %689 = vmatpush2.bf16.msra.mxu0 %v468
    %690 = vmatprep.subr.bf16.mxu0 %v467
    %691 = vmatpush2.bf16.msra.mxu0 %v466
    %692 = vmatprep.subr.bf16.mxu0 %v465
    %693 = vmatpush2.bf16.msra.mxu0 %v464
    %694 = vmatprep.subr.bf16.mxu0 %v463
    %695 = vmatpush2.bf16.msra.mxu0 %v462
    %696 = vmatprep.subr.bf16.mxu0 %v461
    %697 = vmatpush2.bf16.msra.mxu0 %v460
    %698 = vmatprep.subr.bf16.mxu0 %v459
    %699 = vmatpush2.bf16.msra.mxu0 %v458
    %700 = vmatprep.subr.bf16.mxu0 %v457
    %701 = vmatpush2.bf16.msra.mxu0 %v456
    %702 = vmatprep.subr.bf16.mxu0 %v455
    %703 = vmatpush2.bf16.msra.mxu0 %v454
    %704 = vmatprep.mubr.bf16.mxu0 %v671
    %705 = vmatmul.mubr.bf16.gmra.mxu0 %v670
    %v706 = vpop.f32.mrf.mxu0
    %v707 = vadd.f32 0.0, %v706
    %v708 = vpop.f32.mrf.mxu0
    %v709 = vadd.f32 0.0, %v708
    %v710 = vpop.f32.mrf.mxu0
    %v711 = vpop.f32.mrf.mxu0
    %712 = vdwg.mxu0
    %v713 = vld [vmem:[#allocation2 + $0x3] ss:$0 sm:$0xff]
    %v714 = vadd.f32 %v713, %v707
    %v715 = vld [vmem:[#allocation2 + $0xc] ss:$0 sm:$0xff]
    %v716 = vadd.f32 %v715, %v709
    %v717 = vtanh.pop %v714
    %v718 = vxor.u32 %v714, 2147483648
    %v719 = vmul.f32 %v718, 1.442695
    %v720 = vpow.pop %v719
    %v721 = vadd.f32 %v720, 1.0
    %v722 = vrcp.pop %v721
    %v723 = vmul.f32 1.0, %v722
    %v724 = vsel %vm267, %v717, %v723
    %725 = vrot.lane.b32.xlu0 %v724, 112
    %v726 = vpop.permute.xlu0 %725
    %727 = vrot.lane.b32.xlu0 %v724, 96
    %v728 = vpop.permute.xlu0 %727
    %729 = vrot.lane.b32.xlu0 %v724, 80
    %v730 = vpop.permute.xlu0 %729
    %v731 = vmul.f32 %v726, %v648
    %v732 = vmul.f32 %v724, %v728
    %v733 = vadd.f32 %v731, %v732
    %v734 = vtanh.pop %v733
    %v735 = vmul.f32 %v730, %v734
    %v736 = vtanh.pop %v716
    %v737 = vxor.u32 %v716, 2147483648
    %v738 = vmul.f32 %v737, 1.442695
    %v739 = vpow.pop %v738
    %v740 = vadd.f32 %v739, 1.0
    %v741 = vrcp.pop %v740
    %v742 = vmul.f32 1.0, %v741
    %v743 = vsel %vm267, %v736, %v742
    %744 = vrot.lane.b32.xlu0 %v743, 112
    %v745 = vpop.permute.xlu0 %744
    %746 = vrot.lane.b32.xlu0 %v743, 96
    %v747 = vpop.permute.xlu0 %746
    %748 = vrot.lane.b32.xlu0 %v743, 80
    %v749 = vpop.permute.xlu0 %748
    %v750 = vmul.f32 %v745, %v667
    %v751 = vmul.f32 %v743, %v747
    %v752 = vadd.f32 %v750, %v751
    %v753 = vtanh.pop %v752
    %v754 = vmul.f32 %v749, %v753
    %v755 = vpack.c.bf16 %v735, %v735
    %v756 = vpack.c.bf16 %v754, %v754
    %757 = vmatprep.subr.bf16.mxu0 %v453
    %758 = vmatpush1.bf16.msra.mxu0 %v452
    %759 = vmatprep.subr.bf16.mxu0 %v451
    %760 = vmatpush1.bf16.msra.mxu0 %v450
    %761 = vmatprep.subr.bf16.mxu0 %v449
    %762 = vmatpush1.bf16.msra.mxu0 %v448
    %763 = vmatprep.subr.bf16.mxu0 %v447
    %764 = vmatpush1.bf16.msra.mxu0 %v446
    %765 = vmatprep.subr.bf16.mxu0 %v445
    %766 = vmatpush1.bf16.msra.mxu0 %v444
    %767 = vmatprep.subr.bf16.mxu0 %v443
    %768 = vmatpush1.bf16.msra.mxu0 %v442
    %769 = vmatprep.subr.bf16.mxu0 %v441
    %770 = vmatpush1.bf16.msra.mxu0 %v440
    %771 = vmatprep.subr.bf16.mxu0 %v439
    %772 = vmatpush1.bf16.msra.mxu0 %v438
    %773 = vmatprep.subr.bf16.mxu0 %v469
    %774 = vmatpush2.bf16.msra.mxu0 %v468
    %775 = vmatprep.subr.bf16.mxu0 %v467
    %776 = vmatpush2.bf16.msra.mxu0 %v466
    %777 = vmatprep.subr.bf16.mxu0 %v465
    %778 = vmatpush2.bf16.msra.mxu0 %v464
    %779 = vmatprep.subr.bf16.mxu0 %v463
    %780 = vmatpush2.bf16.msra.mxu0 %v462
    %781 = vmatprep.subr.bf16.mxu0 %v461
    %782 = vmatpush2.bf16.msra.mxu0 %v460
    %783 = vmatprep.subr.bf16.mxu0 %v459
    %784 = vmatpush2.bf16.msra.mxu0 %v458
    %785 = vmatprep.subr.bf16.mxu0 %v457
    %786 = vmatpush2.bf16.msra.mxu0 %v456
    %787 = vmatprep.subr.bf16.mxu0 %v455
    %788 = vmatpush2.bf16.msra.mxu0 %v454
    %789 = vmatprep.mubr.bf16.mxu0 %v756
    %790 = vmatmul.mubr.bf16.gmra.mxu0 %v755
    %v791 = vpop.f32.mrf.mxu0
    %v792 = vadd.f32 0.0, %v791
    %v793 = vpop.f32.mrf.mxu0
    %v794 = vadd.f32 0.0, %v793
    %v795 = vpop.f32.mrf.mxu0
    %v796 = vpop.f32.mrf.mxu0
    %797 = vdwg.mxu0
    %v798 = vld [vmem:[#allocation2 + $0x4] ss:$0 sm:$0xff]
    %v799 = vadd.f32 %v798, %v792
    %v800 = vld [vmem:[#allocation2 + $0xb] ss:$0 sm:$0xff]
    %v801 = vadd.f32 %v800, %v794
    %v802 = vtanh.pop %v799
    %v803 = vxor.u32 %v799, 2147483648
    %v804 = vmul.f32 %v803, 1.442695
    %v805 = vpow.pop %v804
    %v806 = vadd.f32 %v805, 1.0
    %v807 = vrcp.pop %v806
    %v808 = vmul.f32 1.0, %v807
    %v809 = vsel %vm267, %v802, %v808
    %810 = vrot.lane.b32.xlu0 %v809, 112
    %v811 = vpop.permute.xlu0 %810
    %812 = vrot.lane.b32.xlu0 %v809, 96
    %v813 = vpop.permute.xlu0 %812
    %814 = vrot.lane.b32.xlu0 %v809, 80
    %v815 = vpop.permute.xlu0 %814
    %v816 = vmul.f32 %v811, %v733
    %v817 = vmul.f32 %v809, %v813
    %v818 = vadd.f32 %v816, %v817
    %v819 = vtanh.pop %v818
    %v820 = vmul.f32 %v815, %v819
    %v821 = vtanh.pop %v801
    %v822 = vxor.u32 %v801, 2147483648
    %v823 = vmul.f32 %v822, 1.442695
    %v824 = vpow.pop %v823
    %v825 = vadd.f32 %v824, 1.0
    %v826 = vrcp.pop %v825
    %v827 = vmul.f32 1.0, %v826
    %v828 = vsel %vm267, %v821, %v827
    %829 = vrot.lane.b32.xlu0 %v828, 112
    %v830 = vpop.permute.xlu0 %829
    %831 = vrot.lane.b32.xlu0 %v828, 96
    %v832 = vpop.permute.xlu0 %831
    %833 = vrot.lane.b32.xlu0 %v828, 80
    %v834 = vpop.permute.xlu0 %833
    %v835 = vmul.f32 %v830, %v752
    %v836 = vmul.f32 %v828, %v832
    %v837 = vadd.f32 %v835, %v836
    %v838 = vtanh.pop %v837
    %v839 = vmul.f32 %v834, %v838
    %v840 = vpack.c.bf16 %v820, %v820
    %v841 = vpack.c.bf16 %v839, %v839
    %842 = vmatprep.subr.bf16.mxu0 %v453
    %843 = vmatpush1.bf16.msra.mxu0 %v452
    %844 = vmatprep.subr.bf16.mxu0 %v451
    %845 = vmatpush1.bf16.msra.mxu0 %v450
    %846 = vmatprep.subr.bf16.mxu0 %v449
    %847 = vmatpush1.bf16.msra.mxu0 %v448
    %848 = vmatprep.subr.bf16.mxu0 %v447
    %849 = vmatpush1.bf16.msra.mxu0 %v446
    %850 = vmatprep.subr.bf16.mxu0 %v445
    %851 = vmatpush1.bf16.msra.mxu0 %v444
    %852 = vmatprep.subr.bf16.mxu0 %v443
    %853 = vmatpush1.bf16.msra.mxu0 %v442
    %854 = vmatprep.subr.bf16.mxu0 %v441
    %855 = vmatpush1.bf16.msra.mxu0 %v440
    %856 = vmatprep.subr.bf16.mxu0 %v439
    %857 = vmatpush1.bf16.msra.mxu0 %v438
    %858 = vmatprep.subr.bf16.mxu0 %v469
    %859 = vmatpush2.bf16.msra.mxu0 %v468
    %860 = vmatprep.subr.bf16.mxu0 %v467
    %861 = vmatpush2.bf16.msra.mxu0 %v466
    %862 = vmatprep.subr.bf16.mxu0 %v465
    %863 = vmatpush2.bf16.msra.mxu0 %v464
    %864 = vmatprep.subr.bf16.mxu0 %v463
    %865 = vmatpush2.bf16.msra.mxu0 %v462
    %866 = vmatprep.subr.bf16.mxu0 %v461
    %867 = vmatpush2.bf16.msra.mxu0 %v460
    %868 = vmatprep.subr.bf16.mxu0 %v459
    %869 = vmatpush2.bf16.msra.mxu0 %v458
    %870 = vmatprep.subr.bf16.mxu0 %v457
    %871 = vmatpush2.bf16.msra.mxu0 %v456
    %872 = vmatprep.subr.bf16.mxu0 %v455
    %873 = vmatpush2.bf16.msra.mxu0 %v454
    %874 = vmatprep.mubr.bf16.mxu0 %v841
    %875 = vmatmul.mubr.bf16.gmra.mxu0 %v840
    %v876 = vpop.f32.mrf.mxu0
    %v877 = vadd.f32 0.0, %v876
    %v878 = vpop.f32.mrf.mxu0
    %v879 = vadd.f32 0.0, %v878
    %v880 = vpop.f32.mrf.mxu0
    %v881 = vpop.f32.mrf.mxu0
    %882 = vdwg.mxu0
    %v883 = vld [vmem:[#allocation2 + $0x5] ss:$0 sm:$0xff]
    %v884 = vadd.f32 %v883, %v877
    %v885 = vld [vmem:[#allocation2 + $0xa] ss:$0 sm:$0xff]
    %v886 = vadd.f32 %v885, %v879
    %v887 = vtanh.pop %v884
    %v888 = vxor.u32 %v884, 2147483648
    %v889 = vmul.f32 %v888, 1.442695
    %v890 = vpow.pop %v889
    %v891 = vadd.f32 %v890, 1.0
    %v892 = vrcp.pop %v891
    %v893 = vmul.f32 1.0, %v892
    %v894 = vsel %vm267, %v887, %v893
    %895 = vrot.lane.b32.xlu0 %v894, 112
    %v896 = vpop.permute.xlu0 %895
    %897 = vrot.lane.b32.xlu0 %v894, 96
    %v898 = vpop.permute.xlu0 %897
    %899 = vrot.lane.b32.xlu0 %v894, 80
    %v900 = vpop.permute.xlu0 %899
    %v901 = vmul.f32 %v896, %v818
    %v902 = vmul.f32 %v894, %v898
    %v903 = vadd.f32 %v901, %v902
    %v904 = vtanh.pop %v903
    %v905 = vmul.f32 %v900, %v904
    %v906 = vtanh.pop %v886
    %v907 = vxor.u32 %v886, 2147483648
    %v908 = vmul.f32 %v907, 1.442695
    %v909 = vpow.pop %v908
    %v910 = vadd.f32 %v909, 1.0
    %v911 = vrcp.pop %v910
    %v912 = vmul.f32 1.0, %v911
    %v913 = vsel %vm267, %v906, %v912
    %914 = vrot.lane.b32.xlu0 %v913, 112
    %v915 = vpop.permute.xlu0 %914
    %916 = vrot.lane.b32.xlu0 %v913, 96
    %v917 = vpop.permute.xlu0 %916
    %918 = vrot.lane.b32.xlu0 %v913, 80
    %v919 = vpop.permute.xlu0 %918
    %v920 = vmul.f32 %v915, %v837
    %v921 = vmul.f32 %v913, %v917
    %v922 = vadd.f32 %v920, %v921
    %v923 = vtanh.pop %v922
    %v924 = vmul.f32 %v919, %v923
    %v925 = vpack.c.bf16 %v905, %v905
    %v926 = vpack.c.bf16 %v924, %v924
    %927 = vmatprep.subr.bf16.mxu0 %v453
    %928 = vmatpush1.bf16.msra.mxu0 %v452
    %929 = vmatprep.subr.bf16.mxu0 %v451
    %930 = vmatpush1.bf16.msra.mxu0 %v450
    %931 = vmatprep.subr.bf16.mxu0 %v449
    %932 = vmatpush1.bf16.msra.mxu0 %v448
    %933 = vmatprep.subr.bf16.mxu0 %v447
    %934 = vmatpush1.bf16.msra.mxu0 %v446
    %935 = vmatprep.subr.bf16.mxu0 %v445
    %936 = vmatpush1.bf16.msra.mxu0 %v444
    %937 = vmatprep.subr.bf16.mxu0 %v443
    %938 = vmatpush1.bf16.msra.mxu0 %v442
    %939 = vmatprep.subr.bf16.mxu0 %v441
    %940 = vmatpush1.bf16.msra.mxu0 %v440
    %941 = vmatprep.subr.bf16.mxu0 %v439
    %942 = vmatpush1.bf16.msra.mxu0 %v438
    %943 = vmatprep.subr.bf16.mxu0 %v469
    %944 = vmatpush2.bf16.msra.mxu0 %v468
    %945 = vmatprep.subr.bf16.mxu0 %v467
    %946 = vmatpush2.bf16.msra.mxu0 %v466
    %947 = vmatprep.subr.bf16.mxu0 %v465
    %948 = vmatpush2.bf16.msra.mxu0 %v464
    %949 = vmatprep.subr.bf16.mxu0 %v463
    %950 = vmatpush2.bf16.msra.mxu0 %v462
    %951 = vmatprep.subr.bf16.mxu0 %v461
    %952 = vmatpush2.bf16.msra.mxu0 %v460
    %953 = vmatprep.subr.bf16.mxu0 %v459
    %954 = vmatpush2.bf16.msra.mxu0 %v458
    %955 = vmatprep.subr.bf16.mxu0 %v457
    %956 = vmatpush2.bf16.msra.mxu0 %v456
    %957 = vmatprep.subr.bf16.mxu0 %v455
    %958 = vmatpush2.bf16.msra.mxu0 %v454
    %959 = vmatprep.mubr.bf16.mxu0 %v926
    %960 = vmatmul.mubr.bf16.gmra.mxu0 %v925
    %v961 = vpop.f32.mrf.mxu0
    %v962 = vadd.f32 0.0, %v961
    %v963 = vpop.f32.mrf.mxu0
    %v964 = vadd.f32 0.0, %v963
    %v965 = vpop.f32.mrf.mxu0
    %v966 = vpop.f32.mrf.mxu0
    %967 = vdwg.mxu0
    %v968 = vld [vmem:[#allocation2 + $0x6] ss:$0 sm:$0xff]
    %v969 = vadd.f32 %v968, %v962
    %v970 = vld [vmem:[#allocation2 + $0x9] ss:$0 sm:$0xff]
    %v971 = vadd.f32 %v970, %v964
    %v972 = vtanh.pop %v969
    %v973 = vxor.u32 %v969, 2147483648
    %v974 = vmul.f32 %v973, 1.442695
    %v975 = vpow.pop %v974
    %v976 = vadd.f32 %v975, 1.0
    %v977 = vrcp.pop %v976
    %v978 = vmul.f32 1.0, %v977
    %v979 = vsel %vm267, %v972, %v978
    %980 = vrot.lane.b32.xlu0 %v979, 112
    %v981 = vpop.permute.xlu0 %980
    %982 = vrot.lane.b32.xlu0 %v979, 96
    %v983 = vpop.permute.xlu0 %982
    %984 = vrot.lane.b32.xlu0 %v979, 80
    %v985 = vpop.permute.xlu0 %984
    %v986 = vmul.f32 %v981, %v903
    %v987 = vmul.f32 %v979, %v983
    %v988 = vadd.f32 %v986, %v987
    %v989 = vtanh.pop %v988
    %v990 = vmul.f32 %v985, %v989
    %v991 = vtanh.pop %v971
    %v992 = vxor.u32 %v971, 2147483648
    %v993 = vmul.f32 %v992, 1.442695
    %v994 = vpow.pop %v993
    %v995 = vadd.f32 %v994, 1.0
    %v996 = vrcp.pop %v995
    %v997 = vmul.f32 1.0, %v996
    %v998 = vsel %vm267, %v991, %v997
    %999 = vrot.lane.b32.xlu0 %v998, 112
    %v1000 = vpop.permute.xlu0 %999
    %1001 = vrot.lane.b32.xlu0 %v998, 96
    %v1002 = vpop.permute.xlu0 %1001
    %1003 = vrot.lane.b32.xlu0 %v998, 80
    %v1004 = vpop.permute.xlu0 %1003
    %v1005 = vmul.f32 %v1000, %v922
    %v1006 = vmul.f32 %v998, %v1002
    %v1007 = vadd.f32 %v1005, %v1006
    %v1008 = vtanh.pop %v1007
    %v1009 = vmul.f32 %v1004, %v1008
    %v1010 = vpack.c.bf16 %v990, %v990
    %v1011 = vpack.c.bf16 %v1009, %v1009
    %1012 = vmatprep.subr.bf16.mxu0 %v453
    %1013 = vmatpush1.bf16.msra.mxu0 %v452
    %1014 = vmatprep.subr.bf16.mxu0 %v451
    %1015 = vmatpush1.bf16.msra.mxu0 %v450
    %1016 = vmatprep.subr.bf16.mxu0 %v449
    %1017 = vmatpush1.bf16.msra.mxu0 %v448
    %1018 = vmatprep.subr.bf16.mxu0 %v447
    %1019 = vmatpush1.bf16.msra.mxu0 %v446
    %1020 = vmatprep.subr.bf16.mxu0 %v445
    %1021 = vmatpush1.bf16.msra.mxu0 %v444
    %1022 = vmatprep.subr.bf16.mxu0 %v443
    %1023 = vmatpush1.bf16.msra.mxu0 %v442
    %1024 = vmatprep.subr.bf16.mxu0 %v441
    %1025 = vmatpush1.bf16.msra.mxu0 %v440
    %1026 = vmatprep.subr.bf16.mxu0 %v439
    %1027 = vmatpush1.bf16.msra.mxu0 %v438
    %1028 = vmatprep.subr.bf16.mxu0 %v469
    %1029 = vmatpush2.bf16.msra.mxu0 %v468
    %1030 = vmatprep.subr.bf16.mxu0 %v467
    %1031 = vmatpush2.bf16.msra.mxu0 %v466
    %1032 = vmatprep.subr.bf16.mxu0 %v465
    %1033 = vmatpush2.bf16.msra.mxu0 %v464
    %1034 = vmatprep.subr.bf16.mxu0 %v463
    %1035 = vmatpush2.bf16.msra.mxu0 %v462
    %1036 = vmatprep.subr.bf16.mxu0 %v461
    %1037 = vmatpush2.bf16.msra.mxu0 %v460
    %1038 = vmatprep.subr.bf16.mxu0 %v459
    %1039 = vmatpush2.bf16.msra.mxu0 %v458
    %1040 = vmatprep.subr.bf16.mxu0 %v457
    %1041 = vmatpush2.bf16.msra.mxu0 %v456
    %1042 = vmatprep.subr.bf16.mxu0 %v455
    %1043 = vmatpush2.bf16.msra.mxu0 %v454
    %1044 = vmatprep.mubr.bf16.mxu0 %v1011
    %1045 = vmatmul.mubr.bf16.gmra.mxu0 %v1010
    %v1046 = vpop.f32.mrf.mxu0
    %v1047 = vadd.f32 0.0, %v1046
    %v1048 = vpop.f32.mrf.mxu0
    %v1049 = vadd.f32 0.0, %v1048
    %v1050 = vpop.f32.mrf.mxu0
    %v1051 = vpop.f32.mrf.mxu0
    %1052 = vdwg.mxu0
    %v1053 = vld [vmem:[#allocation2 + $0x7] ss:$0 sm:$0xff]
    %v1054 = vadd.f32 %v1053, %v1047
    %v1055 = vld [vmem:[#allocation2 + $0x8] ss:$0 sm:$0xff]
    %v1056 = vadd.f32 %v1055, %v1049
    %v1057 = vtanh.pop %v1054
    %v1058 = vxor.u32 %v1054, 2147483648
    %v1059 = vmul.f32 %v1058, 1.442695
    %v1060 = vpow.pop %v1059
    %v1061 = vadd.f32 %v1060, 1.0
    %v1062 = vrcp.pop %v1061
    %v1063 = vmul.f32 1.0, %v1062
    %v1064 = vsel %vm267, %v1057, %v1063
    %1065 = vrot.lane.b32.xlu0 %v1064, 112
    %v1066 = vpop.permute.xlu0 %1065
    %1067 = vrot.lane.b32.xlu0 %v1064, 96
    %v1068 = vpop.permute.xlu0 %1067
    %1069 = vrot.lane.b32.xlu0 %v1064, 80
    %v1070 = vpop.permute.xlu0 %1069
    %v1071 = vmul.f32 %v1066, %v988
    %v1072 = vmul.f32 %v1064, %v1068
    %v1073 = vadd.f32 %v1071, %v1072
    %v1074 = vtanh.pop %v1073
    %v1075 = vmul.f32 %v1070, %v1074
    %v1076 = vtanh.pop %v1056
    %v1077 = vxor.u32 %v1056, 2147483648
    %v1078 = vmul.f32 %v1077, 1.442695
    %v1079 = vpow.pop %v1078
    %v1080 = vadd.f32 %v1079, 1.0
    %v1081 = vrcp.pop %v1080
    %v1082 = vmul.f32 1.0, %v1081
    %v1083 = vsel %vm267, %v1076, %v1082
    %1084 = vrot.lane.b32.xlu0 %v1083, 112
    %v1085 = vpop.permute.xlu0 %1084
    %1086 = vrot.lane.b32.xlu0 %v1083, 96
    %v1087 = vpop.permute.xlu0 %1086
    %1088 = vrot.lane.b32.xlu0 %v1083, 80
    %v1089 = vpop.permute.xlu0 %1088
    %v1090 = vmul.f32 %v1085, %v1007
    %v1091 = vmul.f32 %v1083, %v1087
    %v1092 = vadd.f32 %v1090, %v1091
    %v1093 = vtanh.pop %v1092
    %v1094 = vmul.f32 %v1089, %v1093
    %v1096 = vrot.slane %v565, 7
    %v1099 = vrot.slane %v650, 6
    %v1102 = vrot.slane %v735, 5
    %v1105 = vrot.slane %v820, 4
    %v1108 = vrot.slane %v905, 3
    %v1111 = vrot.slane %v990, 2
    %v1114 = vrot.slane %v1075, 1
    %vm1116 = vcmask 1040384
    %v1117 = vsel %vm1116, %v288, %v1096
    %vm1118 = vcmask 1041408
    %v1119 = vsel %vm1118, %v1117, %v1099
    %vm1120 = vcmask 1042432
    %v1121 = vsel %vm1120, %v1119, %v1102
    %vm1122 = vcmask 1043456
    %v1123 = vsel %vm1122, %v1121, %v1105
    %vm1124 = vcmask 1044480
    %v1125 = vsel %vm1124, %v1123, %v1108
    %vm1126 = vcmask 1045504
    %v1127 = vsel %vm1126, %v1125, %v1111
    %vm1128 = vcmask 1046528
    %v1129 = vsel %vm1128, %v1127, %v1114
    %v1131 = vrot.slane %v1009, 7
    %v1134 = vrot.slane %v924, 6
    %v1137 = vrot.slane %v839, 5
    %v1140 = vrot.slane %v754, 4
    %v1143 = vrot.slane %v669, 3
    %v1146 = vrot.slane %v584, 2
    %v1149 = vrot.slane %v307, 1
    %v1151 = vsel %vm1116, %v1094, %v1131
    %v1152 = vsel %vm1118, %v1151, %v1134
    %v1153 = vsel %vm1120, %v1152, %v1137
    %v1154 = vsel %vm1122, %v1153, %v1140
    %v1155 = vsel %vm1124, %v1154, %v1143
    %v1156 = vsel %vm1126, %v1155, %v1146
    %v1157 = vsel %vm1128, %v1156, %v1149
    %v1158 = vpack.c.bf16 %v1129, %v1129
    %v1159 = vpack.c.bf16 %v1157, %v1157
    %v1160 = vld [vmem:[#allocation8] sm:$0xf]
    %v1161 = vld [vmem:[#allocation8 + $0x4] sm:$0xf]
    %v1162 = vld [vmem:[#allocation8 + $0x8] sm:$0xf]
    %v1163 = vld [vmem:[#allocation8 + $0xc] sm:$0xf]
    %v1164 = vld [vmem:[#allocation8 + $0x10] sm:$0xf]
    %v1165 = vld [vmem:[#allocation8 + $0x14] sm:$0xf]
    %v1166 = vld [vmem:[#allocation8 + $0x18] sm:$0xf]
    %v1167 = vld [vmem:[#allocation8 + $0x1c] sm:$0xf]
    %v1168 = vld [vmem:[#allocation8 + $0x20] sm:$0xf]
    %v1169 = vld [vmem:[#allocation8 + $0x24] sm:$0xf]
    %v1170 = vld [vmem:[#allocation8 + $0x28] sm:$0xf]
    %v1171 = vld [vmem:[#allocation8 + $0x2c] sm:$0xf]
    %v1172 = vld [vmem:[#allocation8 + $0x30] sm:$0xf]
    %v1173 = vld [vmem:[#allocation8 + $0x34] sm:$0xf]
    %v1174 = vld [vmem:[#allocation8 + $0x38] sm:$0xf]
    %v1175 = vld [vmem:[#allocation8 + $0x3c] sm:$0xf]
    %v1176 = vld [vmem:[#allocation8 + $0x40] sm:$0xf]
    %v1177 = vld [vmem:[#allocation8 + $0x44] sm:$0xf]
    %v1178 = vld [vmem:[#allocation8 + $0x48] sm:$0xf]
    %v1179 = vld [vmem:[#allocation8 + $0x4c] sm:$0xf]
    %v1180 = vld [vmem:[#allocation8 + $0x50] sm:$0xf]
    %v1181 = vld [vmem:[#allocation8 + $0x54] sm:$0xf]
    %v1182 = vld [vmem:[#allocation8 + $0x58] sm:$0xf]
    %v1183 = vld [vmem:[#allocation8 + $0x5c] sm:$0xf]
    %v1184 = vld [vmem:[#allocation8 + $0x60] sm:$0xf]
    %v1185 = vld [vmem:[#allocation8 + $0x64] sm:$0xf]
    %v1186 = vld [vmem:[#allocation8 + $0x68] sm:$0xf]
    %v1187 = vld [vmem:[#allocation8 + $0x6c] sm:$0xf]
    %v1188 = vld [vmem:[#allocation8 + $0x70] sm:$0xf]
    %v1189 = vld [vmem:[#allocation8 + $0x74] sm:$0xf]
    %v1190 = vld [vmem:[#allocation8 + $0x78] sm:$0xf]
    %v1191 = vld [vmem:[#allocation8 + $0x7c] sm:$0xf]
    %v1192 = vld [vmem:[%s6] sm:$0x1]
    %v1194 = vlaneseq
    %v1195 = vshrl.u32 %v1194, 7
    %v1196 = vsub.s32 0, %v1195
    %v1197 = vrot.slane %v1192, %v1196
    %v1231 = vunpack.c.l.b16 %v1160
    %v1232 = vunpack.c.l.b16 %v1161
    %v1233 = vunpack.c.l.b16 %v1162
    %v1234 = vunpack.c.l.b16 %v1163
    %v1235 = vunpack.c.l.b16 %v1164
    %v1236 = vunpack.c.l.b16 %v1165
    %v1237 = vunpack.c.l.b16 %v1166
    %v1238 = vunpack.c.l.b16 %v1167
    %v1239 = vunpack.c.l.b16 %v1168
    %v1240 = vunpack.c.l.b16 %v1169
    %v1241 = vunpack.c.l.b16 %v1170
    %v1242 = vunpack.c.l.b16 %v1171
    %v1243 = vunpack.c.l.b16 %v1172
    %v1244 = vunpack.c.l.b16 %v1173
    %v1245 = vunpack.c.l.b16 %v1174
    %v1246 = vunpack.c.l.b16 %v1175
    %v1247 = vunpack.c.l.b16 %v1176
    %v1248 = vunpack.c.l.b16 %v1177
    %v1249 = vunpack.c.l.b16 %v1178
    %v1250 = vunpack.c.l.b16 %v1179
    %v1251 = vunpack.c.l.b16 %v1180
    %v1252 = vunpack.c.l.b16 %v1181
    %v1253 = vunpack.c.l.b16 %v1182
    %v1254 = vunpack.c.l.b16 %v1183
    %v1255 = vunpack.c.l.b16 %v1184
    %v1256 = vunpack.c.l.b16 %v1185
    %v1257 = vunpack.c.l.b16 %v1186
    %v1258 = vunpack.c.l.b16 %v1187
    %v1259 = vunpack.c.l.b16 %v1188
    %v1260 = vunpack.c.l.b16 %v1189
    %v1261 = vunpack.c.l.b16 %v1190
    %v1262 = vunpack.c.l.b16 %v1191
    %v1263 = vpack.c.b16 %v1232, %v1231
    %v1264 = vpack.c.b16 %v1234, %v1233
    %v1265 = vpack.c.b16 %v1236, %v1235
    %v1266 = vpack.c.b16 %v1238, %v1237
    %v1267 = vpack.c.b16 %v1240, %v1239
    %v1268 = vpack.c.b16 %v1242, %v1241
    %v1269 = vpack.c.b16 %v1244, %v1243
    %v1270 = vpack.c.b16 %v1246, %v1245
    %v1271 = vpack.c.b16 %v1248, %v1247
    %v1272 = vpack.c.b16 %v1250, %v1249
    %v1273 = vpack.c.b16 %v1252, %v1251
    %v1274 = vpack.c.b16 %v1254, %v1253
    %v1275 = vpack.c.b16 %v1256, %v1255
    %v1276 = vpack.c.b16 %v1258, %v1257
    %v1277 = vpack.c.b16 %v1260, %v1259
    %v1278 = vpack.c.b16 %v1262, %v1261
    %1295 = vmatprep.subr.bf16.mxu0 0
    %1296 = vmatpush1.bf16.msra.mxu0 %v1270
    %1297 = vmatprep.subr.bf16.mxu0 0
    %1298 = vmatpush1.bf16.msra.mxu0 %v1269
    %1299 = vmatprep.subr.bf16.mxu0 0
    %1300 = vmatpush1.bf16.msra.mxu0 %v1268
    %1301 = vmatprep.subr.bf16.mxu0 0
    %1302 = vmatpush1.bf16.msra.mxu0 %v1267
    %1303 = vmatprep.subr.bf16.mxu0 0
    %1304 = vmatpush1.bf16.msra.mxu0 %v1266
    %1305 = vmatprep.subr.bf16.mxu0 0
    %1306 = vmatpush1.bf16.msra.mxu0 %v1265
    %1307 = vmatprep.subr.bf16.mxu0 0
    %1308 = vmatpush1.bf16.msra.mxu0 %v1264
    %1309 = vmatprep.subr.bf16.mxu0 0
    %1310 = vmatpush1.bf16.msra.mxu0 %v1263
    %1311 = vmatprep.subr.bf16.mxu0 0
    %1312 = vmatpush2.bf16.msra.mxu0 %v1278
    %1313 = vmatprep.subr.bf16.mxu0 0
    %1314 = vmatpush2.bf16.msra.mxu0 %v1277
    %1315 = vmatprep.subr.bf16.mxu0 0
    %1316 = vmatpush2.bf16.msra.mxu0 %v1276
    %1317 = vmatprep.subr.bf16.mxu0 0
    %1318 = vmatpush2.bf16.msra.mxu0 %v1275
    %1319 = vmatprep.subr.bf16.mxu0 0
    %1320 = vmatpush2.bf16.msra.mxu0 %v1274
    %1321 = vmatprep.subr.bf16.mxu0 0
    %1322 = vmatpush2.bf16.msra.mxu0 %v1273
    %1323 = vmatprep.subr.bf16.mxu0 0
    %1324 = vmatpush2.bf16.msra.mxu0 %v1272
    %1325 = vmatprep.subr.bf16.mxu0 0
    %1326 = vmatpush2.bf16.msra.mxu0 %v1271
    %1327 = vmatprep.mubr.bf16.mxu0 %v1159
    %1328 = vmatmul.mubr.bf16.gmra.mxu0 %v1158
    %v1329 = vpop.f32.mrf.mxu0
    %v1330 = vadd.f32 %v1197, %v1329
    %v1331 = vpop.f32.mrf.mxu0
    %v1332 = vpop.f32.mrf.mxu0
    %v1333 = vpop.f32.mrf.mxu0
    %1334 = vdwg.mxu0
    %v1335 = vtanh.pop %v1330
    %v1336 = vld [vmem:[%s7] sm:$0x1]
    %v1338 = vlaneseq
    %v1339 = vshrl.u32 %v1338, 7
    %v1340 = vsub.s32 0, %v1339
    %v1341 = vrot.slane %v1336, %v1340
    %v1343 = vmul.f32 %v1335, %v1341
    %1344 = vadd.xlane.f32.xlu0 %v1343
    %v1345 = vpop.xlane.xlu0 %1344
    %v1346 = vrot.slane %v1345, 4
    %v1347 = vmax.f32 %v1345, %v1346
    %v1348 = vrot.slane %v1347, 2
    %v1349 = vmax.f32 %v1347, %v1348
    %v1350 = vrot.slane %v1349, 1
    %v1351 = vmax.f32 %v1349, %v1350
    %v1352 = vsub.f32 %v1345, %v1351
    %v1353 = vmul.f32 %v1352, 1.442695
    %v1354 = vpow.pop %v1353
    %v1355 = vrot.slane %v1354, 4
    %v1356 = vadd.f32 %v1354, %v1355
    %v1357 = vrot.slane %v1356, 2
    %v1358 = vadd.f32 %v1356, %v1357
    %v1359 = vrot.slane %v1358, 1
    %v1360 = vadd.f32 %v1358, %v1359
    %v1361 = vrcp.pop %v1360
    %v1362 = vmul.f32 %v1354, %v1361
    %v1363 = vmul.f32 %v1129, %v1362
    %v1364 = vmul.f32 %v1157, %v1362
    %v1365 = vrot.slane %v1363, 4
    %v1366 = vadd.f32 %v1363, %v1365
    %v1367 = vrot.slane %v1366, 2
    %v1368 = vadd.f32 %v1366, %v1367
    %v1369 = vrot.slane %v1368, 1
    %v1370 = vadd.f32 %v1368, %v1369
    %v1371 = vrot.slane %v1364, 4
    %v1372 = vadd.f32 %v1364, %v1371
    %v1373 = vrot.slane %v1372, 2
    %v1374 = vadd.f32 %v1372, %v1373
    %v1375 = vrot.slane %v1374, 1
    %v1376 = vadd.f32 %v1374, %v1375
    %v1377 = vpack.c.bf16 %v1370, %v1370
    %v1378 = vpack.c.bf16 %v1376, %v1376
    %v1379 = vld [vmem:[#allocation11] sm:$0xf]
    %v1380 = vld [vmem:[#allocation11 + $0x4] sm:$0xf]
    %v1381 = vld [vmem:[#allocation11 + $0x8] sm:$0xf]
    %v1382 = vld [vmem:[#allocation11 + $0xc] sm:$0xf]
    %v1383 = vld [vmem:[#allocation11 + $0x10] sm:$0xf]
    %v1384 = vld [vmem:[#allocation11 + $0x14] sm:$0xf]
    %v1385 = vld [vmem:[#allocation11 + $0x18] sm:$0xf]
    %v1386 = vld [vmem:[#allocation11 + $0x1c] sm:$0xf]
    %v1387 = vld [vmem:[#allocation11 + $0x20] sm:$0xf]
    %v1388 = vld [vmem:[#allocation11 + $0x24] sm:$0xf]
    %v1389 = vld [vmem:[#allocation11 + $0x28] sm:$0xf]
    %v1390 = vld [vmem:[#allocation11 + $0x2c] sm:$0xf]
    %v1391 = vld [vmem:[#allocation11 + $0x30] sm:$0xf]
    %v1392 = vld [vmem:[#allocation11 + $0x34] sm:$0xf]
    %v1393 = vld [vmem:[#allocation11 + $0x38] sm:$0xf]
    %v1394 = vld [vmem:[#allocation11 + $0x3c] sm:$0xf]
    %v1395 = vld [vmem:[#allocation11 + $0x40] sm:$0xf]
    %v1396 = vld [vmem:[#allocation11 + $0x44] sm:$0xf]
    %v1397 = vld [vmem:[#allocation11 + $0x48] sm:$0xf]
    %v1398 = vld [vmem:[#allocation11 + $0x4c] sm:$0xf]
    %v1399 = vld [vmem:[#allocation11 + $0x50] sm:$0xf]
    %v1400 = vld [vmem:[#allocation11 + $0x54] sm:$0xf]
    %v1401 = vld [vmem:[#allocation11 + $0x58] sm:$0xf]
    %v1402 = vld [vmem:[#allocation11 + $0x5c] sm:$0xf]
    %v1403 = vld [vmem:[#allocation11 + $0x60] sm:$0xf]
    %v1404 = vld [vmem:[#allocation11 + $0x64] sm:$0xf]
    %v1405 = vld [vmem:[#allocation11 + $0x68] sm:$0xf]
    %v1406 = vld [vmem:[#allocation11 + $0x6c] sm:$0xf]
    %v1407 = vld [vmem:[#allocation11 + $0x70] sm:$0xf]
    %v1408 = vld [vmem:[#allocation11 + $0x74] sm:$0xf]
    %v1409 = vld [vmem:[#allocation11 + $0x78] sm:$0xf]
    %v1410 = vld [vmem:[#allocation11 + $0x7c] sm:$0xf]
    %v1411 = vld [vmem:[%s10] sm:$0x1]
    %v1444 = vunpack.c.l.b16 %v1379
    %v1445 = vunpack.c.l.b16 %v1380
    %v1446 = vunpack.c.l.b16 %v1381
    %v1447 = vunpack.c.l.b16 %v1382
    %v1448 = vunpack.c.l.b16 %v1383
    %v1449 = vunpack.c.l.b16 %v1384
    %v1450 = vunpack.c.l.b16 %v1385
    %v1451 = vunpack.c.l.b16 %v1386
    %v1452 = vunpack.c.l.b16 %v1387
    %v1453 = vunpack.c.l.b16 %v1388
    %v1454 = vunpack.c.l.b16 %v1389
    %v1455 = vunpack.c.l.b16 %v1390
    %v1456 = vunpack.c.l.b16 %v1391
    %v1457 = vunpack.c.l.b16 %v1392
    %v1458 = vunpack.c.l.b16 %v1393
    %v1459 = vunpack.c.l.b16 %v1394
    %v1460 = vunpack.c.l.b16 %v1395
    %v1461 = vunpack.c.l.b16 %v1396
    %v1462 = vunpack.c.l.b16 %v1397
    %v1463 = vunpack.c.l.b16 %v1398
    %v1464 = vunpack.c.l.b16 %v1399
    %v1465 = vunpack.c.l.b16 %v1400
    %v1466 = vunpack.c.l.b16 %v1401
    %v1467 = vunpack.c.l.b16 %v1402
    %v1468 = vunpack.c.l.b16 %v1403
    %v1469 = vunpack.c.l.b16 %v1404
    %v1470 = vunpack.c.l.b16 %v1405
    %v1471 = vunpack.c.l.b16 %v1406
    %v1472 = vunpack.c.l.b16 %v1407
    %v1473 = vunpack.c.l.b16 %v1408
    %v1474 = vunpack.c.l.b16 %v1409
    %v1475 = vunpack.c.l.b16 %v1410
    %v1476 = vpack.c.b16 %v1445, %v1444
    %v1477 = vpack.c.b16 %v1447, %v1446
    %v1478 = vpack.c.b16 %v1449, %v1448
    %v1479 = vpack.c.b16 %v1451, %v1450
    %v1480 = vpack.c.b16 %v1453, %v1452
    %v1481 = vpack.c.b16 %v1455, %v1454
    %v1482 = vpack.c.b16 %v1457, %v1456
    %v1483 = vpack.c.b16 %v1459, %v1458
    %v1484 = vpack.c.b16 %v1461, %v1460
    %v1485 = vpack.c.b16 %v1463, %v1462
    %v1486 = vpack.c.b16 %v1465, %v1464
    %v1487 = vpack.c.b16 %v1467, %v1466
    %v1488 = vpack.c.b16 %v1469, %v1468
    %v1489 = vpack.c.b16 %v1471, %v1470
    %v1490 = vpack.c.b16 %v1473, %v1472
    %v1491 = vpack.c.b16 %v1475, %v1474
    %1508 = vmatprep.subr.bf16.mxu0 0
    %1509 = vmatpush1.bf16.msra.mxu0 %v1483
    %1510 = vmatprep.subr.bf16.mxu0 0
    %1511 = vmatpush1.bf16.msra.mxu0 %v1482
    %1512 = vmatprep.subr.bf16.mxu0 0
    %1513 = vmatpush1.bf16.msra.mxu0 %v1481
    %1514 = vmatprep.subr.bf16.mxu0 0
    %1515 = vmatpush1.bf16.msra.mxu0 %v1480
    %1516 = vmatprep.subr.bf16.mxu0 0
    %1517 = vmatpush1.bf16.msra.mxu0 %v1479
    %1518 = vmatprep.subr.bf16.mxu0 0
    %1519 = vmatpush1.bf16.msra.mxu0 %v1478
    %1520 = vmatprep.subr.bf16.mxu0 0
    %1521 = vmatpush1.bf16.msra.mxu0 %v1477
    %1522 = vmatprep.subr.bf16.mxu0 0
    %1523 = vmatpush1.bf16.msra.mxu0 %v1476
    %1524 = vmatprep.subr.bf16.mxu0 0
    %1525 = vmatpush2.bf16.msra.mxu0 %v1491
    %1526 = vmatprep.subr.bf16.mxu0 0
    %1527 = vmatpush2.bf16.msra.mxu0 %v1490
    %1528 = vmatprep.subr.bf16.mxu0 0
    %1529 = vmatpush2.bf16.msra.mxu0 %v1489
    %1530 = vmatprep.subr.bf16.mxu0 0
    %1531 = vmatpush2.bf16.msra.mxu0 %v1488
    %1532 = vmatprep.subr.bf16.mxu0 0
    %1533 = vmatpush2.bf16.msra.mxu0 %v1487
    %1534 = vmatprep.subr.bf16.mxu0 0
    %1535 = vmatpush2.bf16.msra.mxu0 %v1486
    %1536 = vmatprep.subr.bf16.mxu0 0
    %1537 = vmatpush2.bf16.msra.mxu0 %v1485
    %1538 = vmatprep.subr.bf16.mxu0 0
    %1539 = vmatpush2.bf16.msra.mxu0 %v1484
    %1540 = vmatprep.mubr.bf16.mxu0 %v1378
    %1541 = vmatmul.mubr.bf16.gmra.mxu0 %v1377
    %v1542 = vpop.f32.mrf.mxu0
    %v1543 = vadd.f32 %v1411, %v1542
    %v1544 = vpop.f32.mrf.mxu0
    %v1545 = vpop.f32.mrf.mxu0
    %v1546 = vpop.f32.mrf.mxu0
    %1547 = vdwg.mxu0
    %v1548 = vld [vmem:[%s0] sm:$0x1]
    %v1549 = vld [vmem:[#allocation9] sm:$0xf]
    %v1550 = vld [vmem:[#allocation9 + $0x4] sm:$0xf]
    %v1551 = vld [vmem:[#allocation9 + $0x8] sm:$0xf]
    %v1552 = vld [vmem:[#allocation9 + $0xc] sm:$0xf]
    %v1553 = vld [vmem:[#allocation9 + $0x10] sm:$0xf]
    %v1554 = vld [vmem:[#allocation9 + $0x14] sm:$0xf]
    %v1555 = vld [vmem:[#allocation9 + $0x18] sm:$0xf]
    %v1556 = vld [vmem:[#allocation9 + $0x1c] sm:$0xf]
    %v1557 = vld [vmem:[#allocation9 + $0x20] sm:$0xf]
    %v1558 = vld [vmem:[#allocation9 + $0x24] sm:$0xf]
    %v1559 = vld [vmem:[#allocation9 + $0x28] sm:$0xf]
    %v1560 = vld [vmem:[#allocation9 + $0x2c] sm:$0xf]
    %v1561 = vld [vmem:[#allocation9 + $0x30] sm:$0xf]
    %v1562 = vld [vmem:[#allocation9 + $0x34] sm:$0xf]
    %v1563 = vld [vmem:[#allocation9 + $0x38] sm:$0xf]
    %v1564 = vld [vmem:[#allocation9 + $0x3c] sm:$0xf]
    %v1565 = vlaneseq
    %v1566 = vshrl.u32 %v1565, 7
    %v1567 = vsub.s32 0, %v1566
    %v1568 = vrot.slane %v1543, %v1567
    %v1585 = vunpack.c.l.b16 %v1549
    %v1586 = vunpack.c.l.b16 %v1550
    %v1587 = vunpack.c.l.b16 %v1551
    %v1588 = vunpack.c.l.b16 %v1552
    %v1589 = vunpack.c.l.b16 %v1553
    %v1590 = vunpack.c.l.b16 %v1554
    %v1591 = vunpack.c.l.b16 %v1555
    %v1592 = vunpack.c.l.b16 %v1556
    %v1593 = vunpack.c.l.b16 %v1557
    %v1594 = vunpack.c.l.b16 %v1558
    %v1595 = vunpack.c.l.b16 %v1559
    %v1596 = vunpack.c.l.b16 %v1560
    %v1597 = vunpack.c.l.b16 %v1561
    %v1598 = vunpack.c.l.b16 %v1562
    %v1599 = vunpack.c.l.b16 %v1563
    %v1600 = vunpack.c.l.b16 %v1564
    %v1601 = vpack.c.b16 %v1586, %v1585
    %v1602 = vpack.c.b16 %v1588, %v1587
    %v1603 = vpack.c.b16 %v1590, %v1589
    %v1604 = vpack.c.b16 %v1592, %v1591
    %v1605 = vpack.c.b16 %v1594, %v1593
    %v1606 = vpack.c.b16 %v1596, %v1595
    %v1607 = vpack.c.b16 %v1598, %v1597
    %v1608 = vpack.c.b16 %v1600, %v1599
    %1617 = vmatprep.subr.bf16.mxu0 0
    %1618 = vmatpush1.bf16.msra.mxu0 %v1608
    %1619 = vmatprep.subr.bf16.mxu0 0
    %1620 = vmatpush1.bf16.msra.mxu0 %v1607
    %1621 = vmatprep.subr.bf16.mxu0 0
    %1622 = vmatpush1.bf16.msra.mxu0 %v1606
    %1623 = vmatprep.subr.bf16.mxu0 0
    %1624 = vmatpush1.bf16.msra.mxu0 %v1605
    %1625 = vmatprep.subr.bf16.mxu0 0
    %1626 = vmatpush1.bf16.msra.mxu0 %v1604
    %1627 = vmatprep.subr.bf16.mxu0 0
    %1628 = vmatpush1.bf16.msra.mxu0 %v1603
    %1629 = vmatprep.subr.bf16.mxu0 0
    %1630 = vmatpush1.bf16.msra.mxu0 %v1602
    %1631 = vmatprep.subr.bf16.mxu0 0
    %1632 = vmatpush1.bf16.msra.mxu0 %v1601
    %1633 = vmatprep.subr.bf16.mxu0 0
    %1634 = vmatpush2.bf16.msra.mxu0 0
    %1635 = vmatprep.subr.bf16.mxu0 0
    %1636 = vmatpush2.bf16.msra.mxu0 0
    %1637 = vmatprep.subr.bf16.mxu0 0
    %1638 = vmatpush2.bf16.msra.mxu0 0
    %1639 = vmatprep.subr.bf16.mxu0 0
    %1640 = vmatpush2.bf16.msra.mxu0 0
    %1641 = vmatprep.subr.bf16.mxu0 0
    %1642 = vmatpush2.bf16.msra.mxu0 0
    %1643 = vmatprep.subr.bf16.mxu0 0
    %1644 = vmatpush2.bf16.msra.mxu0 0
    %1645 = vmatprep.subr.bf16.mxu0 0
    %1646 = vmatpush2.bf16.msra.mxu0 0
    %1647 = vmatprep.subr.bf16.mxu0 0
    %1648 = vmatpush2.bf16.msra.mxu0 0
    %1649 = vmatprep.mubr.bf16.mxu0 0
    %1650 = vmatmul.mubr.bf16.gmra.mxu0 %v1548
    %v1651 = vpop.f32.mrf.mxu0
    %v1652 = vadd.f32 %v1568, %v1651
    %v1653 = vpop.f32.mrf.mxu0
    %v1654 = vpop.f32.mrf.mxu0
    %v1655 = vpop.f32.mrf.mxu0
    %1656 = vdwg.mxu0
    %1657 = vst [vmem:[#allocation12] sm:$0x3] %v1652
    %v1658 = vxor.u32 %v1652, 2147483648
    %v1659 = vmul.f32 %v1658, 1.442695
    %v1660 = vpow.pop %v1659
    %v1661 = vadd.f32 %v1660, 1.0
    %v1662 = vrcp.pop %v1661
    %v1663 = vmul.f32 1.0, %v1662
    %1664 = vst [vmem:[#allocation13] sm:$0x3] %v1663
    // Predicated region
    $region66: #{matchnet_forward.1} parent=1 // pred_check
      _
    $region67: #{matchnet_forward.1} parent=1 // pred_check_branch
      %1666 = sbr.rel (0) target = $region69
    $region68: #{matchnet_forward.1} parent=1 // pred_region
      %s1668 = ssub.s32 32, 32
      %1669 = vsyncadd [#allocation5], %s1668
      %s1671 = sshll.u32 [#allocation12], 4
      %s1672 = int_to_ptr.vmem [resolvable:$true] %s1671
      %1674 = dma.vmem_to_hbm [thread:$0]  %s1672, 32, %s11, [#allocation5]
    $region69: #{matchnet_forward.1} parent=1 // pred_fallthru
      _
    // Predicated region
    $region70: #{matchnet_forward.1} parent=1 // pred_check
      _
    $region71: #{matchnet_forward.1} parent=1 // pred_check_branch
      %1676 = sbr.rel (0) target = $region73
    $region72: #{matchnet_forward.1} parent=1 // pred_region
      %s1678 = ssub.s32 32, 32
      %1679 = vsyncadd [#allocation14], %s1678
      %s1681 = sshll.u32 [#allocation13], 4
      %s1682 = int_to_ptr.vmem [resolvable:$true] %s1681
      %1684 = dma.vmem_to_hbm [thread:$0]  %s1682, 32, %s12, [#allocation14]
    $region73: #{matchnet_forward.1} parent=1 // pred_fallthru
      _
    // Predicated region
    $region74: #{matchnet_forward.1} parent=1 // pred_check
      _
    $region75: #{matchnet_forward.1} parent=1 // pred_check_branch
      %1686 = sbr.rel (0) target = $region77
    $region76: #{matchnet_forward.1} parent=1 // pred_region
      %1687 = dma.done [#allocation5], 32
    $region77: #{matchnet_forward.1} parent=1 // pred_fallthru
      _
    // Predicated region
    $region78: #{matchnet_forward.1} parent=1 // pred_check
      _
    $region79: #{matchnet_forward.1} parent=1 // pred_check_branch
      %1689 = sbr.rel (0) target = $region81
    $region80: #{matchnet_forward.1} parent=1 // pred_region
      %1690 = dma.done [#allocation14], 32
    $region81: #{matchnet_forward.1} parent=1 // pred_fallthru
      _
    %1691 = vsyncpa [#allocation4], 1
    %1692 = vsyncpa [#allocation7], 1
    %1693 = vsyncpa [#allocation10], 1
    %1694 = vsyncpa [#allocation5], 1
    %1695 = vsyncpa [#allocation14], 1

</llo_original>
